<compile_context>
chip_gen: v5e
topology: v5e:2x2
jax: 0.10.0
libtpu: 0.0.40
codegen_flags: <defaults>
</compile_context>

<pallas_src>
import functools

import jax
import jax.numpy as jnp
from jax.experimental import pallas as pl
from jax.experimental.pallas import tpu as pltpu

_BN_EPS = 1e-5


# ---------------------------------------------------------------------------
# Fused kernel: grid = (2 passes, num_vocab_tiles)
# ---------------------------------------------------------------------------
def _etm_fused_kernel(nbows_ref, bows_ref, w1_ref, rho_ref, alphas_ref,
                      b1_ref, w2_ref, b2_ref, wmu_ref, bmu_ref,
                      wls_ref, bls_ref, eps_ref,
                      recon_ref, kl_ref,
                      h1_acc, theta_sc, m_sc, l_sc, racc):
    p = pl.program_id(0)            # 0: encoder accum + beta stats, 1: decode
    j = pl.program_id(1)            # vocab tile index
    nvt = pl.num_programs(1)
    inv_b = 1.0 / bows_ref.shape[0]

    # Topic-embedding logits for this vocab tile, directly in (K, Vt):
    # contract rho_size -> no transposes; the vocab softmax is a lane reduce.
    logit = jax.lax.dot_general(
        alphas_ref[...], rho_ref[...],
        dimension_numbers=(((1,), (1,)), ((), ())),
        preferred_element_type=jnp.float32)                      # (K, Vt)

    @pl.when(p == 0)
    def _pass0():
        @pl.when(j == 0)
        def _init():
            h1_acc[...] = jnp.zeros_like(h1_acc)
            m_sc[...] = jnp.full_like(m_sc, -jnp.inf)
            l_sc[...] = jnp.zeros_like(l_sc)
            racc[...] = jnp.zeros_like(racc)

        # encoder layer-1 partial product over this vocab tile (f32 accumulate)
        h1_acc[...] += jnp.dot(nbows_ref[...], w1_ref[...],
                               preferred_element_type=jnp.float32)

        # online softmax statistics (max / sum) for beta over the vocab axis
        m_prev = m_sc[...]
        m_new = jnp.maximum(m_prev, jnp.max(logit, axis=-1, keepdims=True))
        l_sc[...] = (l_sc[...] * jnp.exp(m_prev - m_new)
                     + jnp.sum(jnp.exp(logit - m_new), axis=-1, keepdims=True))
        m_sc[...] = m_new

        @pl.when(j == nvt - 1)
        def _encoder_tail():
            # BatchNorm affines are pre-folded into w2/b2, wmu/bmu, wls/bls.
            h1 = jnp.tanh(h1_acc[...] + b1_ref[...])
            h2 = jnp.tanh(jnp.dot(h1, w2_ref[...],
                                  preferred_element_type=jnp.float32) + b2_ref[...])
            # enc_drop: eval-mode dropout == identity
            mu = jnp.dot(h2, wmu_ref[...],
                         preferred_element_type=jnp.float32) + bmu_ref[...]
            ls = jnp.dot(h2, wls_ref[...],
                         preferred_element_type=jnp.float32) + bls_ref[...]

            # KL(q || N(0, I))
            kl_per = -0.5 * jnp.sum(1.0 + ls - mu * mu - jnp.exp(ls),
                                    axis=-1, keepdims=True)      # (B, 1)
            kl_ref[...] = jnp.mean(kl_per, axis=0, keepdims=True)

            # reparameterize + softmax -> theta stays in VMEM scratch
            z = eps_ref[...] * jnp.exp(0.5 * ls) + mu
            z = z - jnp.max(z, axis=-1, keepdims=True)
            ez = jnp.exp(z)
            theta_sc[...] = ez * pl.reciprocal(
                jnp.sum(ez, axis=-1, keepdims=True), approx=True)

            # pass 1 consumes 1 / l
            l_sc[...] = pl.reciprocal(l_sc[...], approx=True)

    @pl.when(p == 1)
    def _pass1():
        beta_tile = jnp.exp(logit - m_sc[...]) * l_sc[...]       # (K, Vt)
        res = jnp.dot(theta_sc[...], beta_tile,
                      preferred_element_type=jnp.float32)        # (B, Vt)
        per_doc = jnp.sum(bows_ref[...] * jnp.log(res + 1e-6),
                          axis=-1, keepdims=True)                # (B, 1)
        racc[...] += jnp.sum(per_doc, axis=0, keepdims=True)     # (1, 1)

        @pl.when(j == nvt - 1)
        def _recon_tail():
            recon_ref[...] = -racc[...] * inv_b


# ---------------------------------------------------------------------------
# Wrapper: BN folding + BlockSpecs + pallas_call
# ---------------------------------------------------------------------------
def _bn_fold(g, b, m, v):
    s = g * jax.lax.rsqrt(v + _BN_EPS)
    return s, b - m * s


@functools.partial(jax.jit, static_argnames=("predcoef", "v_tile"))
def etm_forward(bows, normalized_bows, eps, params, predcoef=1.0, v_tile=512):
    B, V = bows.shape
    H = params["w1_t"].shape[1]
    K = params["wmu_t"].shape[1]
    R = params["rho_w"].shape[1]

    # Fold the eval-mode BatchNorm affines (exact) into the following linears.
    s1, t1 = _bn_fold(params["bn1_g"], params["bn1_b"], params["bn1_m"], params["bn1_v"])
    s2, t2 = _bn_fold(params["bn2_g"], params["bn2_b"], params["bn2_m"], params["bn2_v"])
    w2_eff = params["w2_t"] * s1.reshape(H, 1)
    b2_eff = t1 @ params["w2_t"] + params["b2"]
    wmu_eff = params["wmu_t"] * s2.reshape(H, 1)
    bmu_eff = t2 @ params["wmu_t"] + params["bmu"]
    wls_eff = params["wls_t"] * s2.reshape(H, 1)
    bls_eff = t2 @ params["wls_t"] + params["bls"]

    # Vocab tile: lane dim of (B, Vt) blocks must be a multiple of 128 (or full V).
    if V % v_tile == 0 and v_tile % 128 == 0:
        vt = v_tile
    else:
        vt = V
    nvt = V // vt

    full = lambda p, j: (0, 0)
    in_specs = [
        pl.BlockSpec((B, vt), lambda p, j: (0, j * (1 - p))),   # normalized_bows (pass 0)
        pl.BlockSpec((B, vt), lambda p, j: (0, j * p)),         # bows            (pass 1)
        pl.BlockSpec((vt, H), lambda p, j: (j * (1 - p), 0)),   # w1_t            (pass 0)
        pl.BlockSpec((vt, R), lambda p, j: (j, 0)),             # rho_w           (both)
        pl.BlockSpec((K, R), full),                             # alphas_w
        pl.BlockSpec((1, H), full),                             # b1
        pl.BlockSpec((H, H), full),                             # w2 (BN1 folded)
        pl.BlockSpec((1, H), full),                             # b2 (BN1 folded)
        pl.BlockSpec((H, K), full),                             # wmu (BN2 folded)
        pl.BlockSpec((1, K), full),                             # bmu (BN2 folded)
        pl.BlockSpec((H, K), full),                             # wls (BN2 folded)
        pl.BlockSpec((1, K), full),                             # bls (BN2 folded)
        pl.BlockSpec((B, K), full),                             # eps
    ]
    out_specs = (pl.BlockSpec((1, 1), full),                    # recon
                 pl.BlockSpec((1, 1), full))                    # kl
    out_shape = (jax.ShapeDtypeStruct((1, 1), jnp.float32),
                 jax.ShapeDtypeStruct((1, 1), jnp.float32))
    scratch_shapes = [
        pltpu.VMEM((B, H), jnp.float32),   # h1 accumulator
        pltpu.VMEM((B, K), jnp.float32),   # theta (never leaves VMEM)
        pltpu.VMEM((K, 1), jnp.float32),   # running max of beta logits
        pltpu.VMEM((K, 1), jnp.float32),   # running sum -> reciprocal
        pltpu.VMEM((1, 1), jnp.float32),   # recon accumulator
    ]

    recon, kl = pl.pallas_call(
        _etm_fused_kernel,
        grid=(2, nvt),
        in_specs=in_specs,
        out_specs=out_specs,
        out_shape=out_shape,
        scratch_shapes=scratch_shapes,
        compiler_params=pltpu.CompilerParams(
            # both axes carry cross-step state (accumulators) -> arbitrary
            dimension_semantics=("arbitrary", "arbitrary")),
    )(normalized_bows, bows, params["w1_t"], params["rho_w"], params["alphas_w"],
      params["b1"], w2_eff, b2_eff, wmu_eff, bmu_eff, wls_eff, bls_eff, eps)

    return recon[0, 0] * predcoef, kl[0, 0]


# ---------------------------------------------------------------------------
# Deterministic parameter init (PyTorch-default-style uniform)
# ---------------------------------------------------------------------------
def init_params(key, V, H, K, R):
    ks = jax.random.split(key, 6)

    def linear(k, fan_in, fan_out):
        bound = 1.0 / (fan_in ** 0.5)
        kw, kb = jax.random.split(k)
        w_t = jax.random.uniform(kw, (fan_in, fan_out), jnp.float32, -bound, bound)
        b = jax.random.uniform(kb, (1, fan_out), jnp.float32, -bound, bound)
        return w_t, b

    w1_t, b1 = linear(ks[0], V, H)           # q_theta Linear(V, H)
    w2_t, b2 = linear(ks[1], H, H)           # q_theta Linear(H, H)
    wmu_t, bmu = linear(ks[2], H, K)         # mu_q_theta
    wls_t, bls = linear(ks[3], H, K)         # logsigma_q_theta

    # rho = nn.Linear(rho_size, vocab_size) -> weight shape (V, R)
    rho_w = jax.random.uniform(ks[4], (V, R), jnp.float32,
                               -1.0 / (R ** 0.5), 1.0 / (R ** 0.5))
    # alphas = nn.Linear(rho_size, num_topics, bias=False) -> weight shape (K, R)
    alphas_w = jax.random.uniform(ks[5], (K, R), jnp.float32,
                                  -1.0 / (R ** 0.5), 1.0 / (R ** 0.5))

    def bn(Hd):  # PyTorch BatchNorm1d defaults: gamma, beta, running_mean, running_var
        return (jnp.ones((1, Hd), jnp.float32), jnp.zeros((1, Hd), jnp.float32),
                jnp.zeros((1, Hd), jnp.float32), jnp.ones((1, Hd), jnp.float32))

    bn1_g, bn1_b, bn1_m, bn1_v = bn(H)
    bn2_g, bn2_b, bn2_m, bn2_v = bn(H)

    return dict(w1_t=w1_t, b1=b1, bn1_g=bn1_g, bn1_b=bn1_b, bn1_m=bn1_m, bn1_v=bn1_v,
                w2_t=w2_t, b2=b2, bn2_g=bn2_g, bn2_b=bn2_b, bn2_m=bn2_m, bn2_v=bn2_v,
                wmu_t=wmu_t, bmu=bmu, wls_t=wls_t, bls=bls,
                rho_w=rho_w, alphas_w=alphas_w)


# ---------------------------------------------------------------------------
# Pure-JAX reference (mirrors the PyTorch forward, eval mode)
# ---------------------------------------------------------------------------
def reference_forward(bows, nbows, eps, p):
    h = jnp.tanh(nbows @ p["w1_t"] + p["b1"])
    h = (h - p["bn1_m"]) / jnp.sqrt(p["bn1_v"] + _BN_EPS) * p["bn1_g"] + p["bn1_b"]
    h = jnp.tanh(h @ p["w2_t"] + p["b2"])
    h = (h - p["bn2_m"]) / jnp.sqrt(p["bn2_v"] + _BN_EPS) * p["bn2_g"] + p["bn2_b"]
    mu = h @ p["wmu_t"] + p["bmu"]
    ls = h @ p["wls_t"] + p["bls"]
    kl = -0.5 * jnp.sum(1.0 + ls - mu ** 2 - jnp.exp(ls), axis=-1).mean()
    theta = jax.nn.softmax(eps * jnp.exp(0.5 * ls) + mu, axis=-1)
    beta = jax.nn.softmax(p["rho_w"] @ p["alphas_w"].T, axis=0).T
    preds = jnp.log(theta @ beta + 1e-6)
    recon = (-(preds * bows).sum(1)).mean()
    return recon, kl


if __name__ == "__main__":
    # num_topics=16, vocab_size=256, t_hidden_size=64, rho_size=64, batch=8
    B, V, H, K, R = 8, 256, 64, 16, 64

    key = jax.random.PRNGKey(0)
    k_bows, k_eps, k_par = jax.random.split(key, 3)

    bows = jax.random.randint(k_bows, (B, V), 0, 5).astype(jnp.float32)
    normalized_bows = bows / jnp.maximum(bows.sum(axis=1, keepdims=True), 1.0)
    eps = jax.random.normal(k_eps, (B, K), jnp.float32)   # reparameterization noise
    params = init_params(k_par, V, H, K, R)

    # v_tile=128 -> 2 vocab tiles, exercises the pipelined grid + accumulators.
    recon_loss, kld_theta = etm_forward(bows, normalized_bows, eps, params,
                                        predcoef=1.0, v_tile=128)
    jax.block_until_ready((recon_loss, kld_theta))

    ref_recon, ref_kl = reference_forward(bows, normalized_bows, eps, params)
    assert jnp.allclose(recon_loss, ref_recon, rtol=2e-3, atol=2e-3), (recon_loss, ref_recon)
    assert jnp.allclose(kld_theta, ref_kl, rtol=2e-3, atol=2e-3), (kld_theta, ref_kl)

    print("KERNEL_OK")
</pallas_src>

<mosaic_0001>
module attributes {stable_mosaic.version = 11 : i64} {
  func.func @_etm_fused_kernel(%arg0: i32, %arg1: i32, %arg2: memref<8x128xf32, #tpu.memory_space<vmem>>, %arg3: memref<8x128xf32, #tpu.memory_space<vmem>>, %arg4: memref<128x64xf32, #tpu.memory_space<vmem>>, %arg5: memref<128x64xf32, #tpu.memory_space<vmem>>, %arg6: memref<16x64xf32, #tpu.memory_space<vmem>>, %arg7: memref<1x64xf32, #tpu.memory_space<vmem>>, %arg8: memref<64x64xf32, #tpu.memory_space<vmem>>, %arg9: memref<1x64xf32, #tpu.memory_space<vmem>>, %arg10: memref<64x16xf32, #tpu.memory_space<vmem>>, %arg11: memref<1x16xf32, #tpu.memory_space<vmem>>, %arg12: memref<64x16xf32, #tpu.memory_space<vmem>>, %arg13: memref<1x16xf32, #tpu.memory_space<vmem>>, %arg14: memref<8x16xf32, #tpu.memory_space<vmem>>, %arg15: memref<1x1xf32, #tpu.memory_space<vmem>>, %arg16: memref<1x1xf32, #tpu.memory_space<vmem>>, %arg17: memref<8x64xf32, #tpu.memory_space<vmem>>, %arg18: memref<8x16xf32, #tpu.memory_space<vmem>>, %arg19: memref<16x1xf32, #tpu.memory_space<vmem>>, %arg20: memref<16x1xf32, #tpu.memory_space<vmem>>, %arg21: memref<1x1xf32, #tpu.memory_space<vmem>>) attributes {dimension_semantics = [#tpu.dimension_semantics<arbitrary>, #tpu.dimension_semantics<arbitrary>], iteration_bounds = array<i64: 2, 2>, scalar_prefetch = 0 : i64, scratch_operands = 5 : i64, tpu.core_type = #tpu.core_type<tc>, window_params = [{transform_indices = @transform_0, window_bounds = array<i64: 8, 128>}, {transform_indices = @transform_1, window_bounds = array<i64: 8, 128>}, {transform_indices = @transform_2, window_bounds = array<i64: 128, 64>}, {transform_indices = @transform_3, window_bounds = array<i64: 128, 64>}, {pipeline_mode = #tpu.pipeline_mode<synchronous>, transform_indices = @transform_4, window_bounds = array<i64: 16, 64>}, {pipeline_mode = #tpu.pipeline_mode<synchronous>, transform_indices = @transform_5, window_bounds = array<i64: 1, 64>}, {pipeline_mode = #tpu.pipeline_mode<synchronous>, transform_indices = @transform_6, window_bounds = array<i64: 64, 64>}, {pipeline_mode = #tpu.pipeline_mode<synchronous>, transform_indices = @transform_7, window_bounds = array<i64: 1, 64>}, {pipeline_mode = #tpu.pipeline_mode<synchronous>, transform_indices = @transform_8, window_bounds = array<i64: 64, 16>}, {pipeline_mode = #tpu.pipeline_mode<synchronous>, transform_indices = @transform_9, window_bounds = array<i64: 1, 16>}, {pipeline_mode = #tpu.pipeline_mode<synchronous>, transform_indices = @transform_10, window_bounds = array<i64: 64, 16>}, {pipeline_mode = #tpu.pipeline_mode<synchronous>, transform_indices = @transform_11, window_bounds = array<i64: 1, 16>}, {pipeline_mode = #tpu.pipeline_mode<synchronous>, transform_indices = @transform_12, window_bounds = array<i64: 8, 16>}, {pipeline_mode = #tpu.pipeline_mode<synchronous>, transform_indices = @transform_13, window_bounds = array<i64: 1, 1>}, {pipeline_mode = #tpu.pipeline_mode<synchronous>, transform_indices = @transform_14, window_bounds = array<i64: 1, 1>}]} {
    %c0 = arith.constant 0 : index
    %c0_0 = arith.constant 0 : index
    %0 = vector.load %arg6[%c0, %c0_0] : memref<16x64xf32, #tpu.memory_space<vmem>>, vector<16x64xf32>
    %c0_1 = arith.constant 0 : index
    %c0_2 = arith.constant 0 : index
    %1 = vector.load %arg5[%c0_1, %c0_2] : memref<128x64xf32, #tpu.memory_space<vmem>>, vector<128x64xf32>
    %cst = arith.constant dense<0.000000e+00> : vector<16x128xf32>
    %2 = tpu.matmul %0, %1, %cst {dimension_numbers = #tpu.dot_dimension_numbers<[1], [1], [0], [0], [0, 0, 1, 0], [], []>} : vector<16x64xf32>, vector<128x64xf32>, vector<16x128xf32> -> vector<16x128xf32>
    %c0_i32 = arith.constant 0 : i32
    %3 = arith.cmpi eq, %arg0, %c0_i32 : i32
    %4 = arith.extui %3 : i1 to i32
    %c0_i32_3 = arith.constant 0 : i32
    %5 = arith.cmpi ne, %4, %c0_i32_3 : i32
    scf.if %5 {
      %c0_i32_5 = arith.constant 0 : i32
      %9 = arith.cmpi eq, %arg1, %c0_i32_5 : i32
      %10 = arith.extui %9 : i1 to i32
      %c0_i32_6 = arith.constant 0 : i32
      %11 = arith.cmpi ne, %10, %c0_i32_6 : i32
      scf.if %11 {
        %cst_28 = arith.constant 0.000000e+00 : f32
        %37 = vector.broadcast %cst_28 : f32 to vector<8x64xf32>
        %c0_29 = arith.constant 0 : index
        %c0_30 = arith.constant 0 : index
        %38 = vector.load %arg17[%c0_29, %c0_30] : memref<8x64xf32, #tpu.memory_space<vmem>>, vector<8x64xf32>
        tpu.vector_store %arg17[%c0_29, %c0_30], %37 {strides = array<i32>} : memref<8x64xf32, #tpu.memory_space<vmem>>, vector<8x64xf32>,
        %cst_31 = arith.constant 0xFF800000 : f32
        %39 = vector.broadcast %cst_31 : f32 to vector<16x1xf32>
        %c0_32 = arith.constant 0 : index
        %c0_33 = arith.constant 0 : index
        %40 = vector.load %arg19[%c0_32, %c0_33] : memref<16x1xf32, #tpu.memory_space<vmem>>, vector<16x1xf32>
        tpu.vector_store %arg19[%c0_32, %c0_33], %39 {strides = array<i32>} : memref<16x1xf32, #tpu.memory_space<vmem>>, vector<16x1xf32>,
        %cst_34 = arith.constant 0.000000e+00 : f32
        %41 = vector.broadcast %cst_34 : f32 to vector<16x1xf32>
        %c0_35 = arith.constant 0 : index
        %c0_36 = arith.constant 0 : index
        %42 = vector.load %arg20[%c0_35, %c0_36] : memref<16x1xf32, #tpu.memory_space<vmem>>, vector<16x1xf32>
        tpu.vector_store %arg20[%c0_35, %c0_36], %41 {strides = array<i32>} : memref<16x1xf32, #tpu.memory_space<vmem>>, vector<16x1xf32>,
        %cst_37 = arith.constant 0.000000e+00 : f32
        %43 = vector.broadcast %cst_37 : f32 to vector<1x1xf32>
        %c0_38 = arith.constant 0 : index
        %c0_39 = arith.constant 0 : index
        %44 = vector.load %arg21[%c0_38, %c0_39] : memref<1x1xf32, #tpu.memory_space<vmem>>, vector<1x1xf32>
        tpu.vector_store %arg21[%c0_38, %c0_39], %43 {strides = array<i32>} : memref<1x1xf32, #tpu.memory_space<vmem>>, vector<1x1xf32>,
      } else {
      }
      %c0_7 = arith.constant 0 : index
      %c0_8 = arith.constant 0 : index
      %12 = vector.load %arg17[%c0_7, %c0_8] : memref<8x64xf32, #tpu.memory_space<vmem>>, vector<8x64xf32>
      %c0_9 = arith.constant 0 : index
      %c0_10 = arith.constant 0 : index
      %13 = vector.load %arg2[%c0_9, %c0_10] : memref<8x128xf32, #tpu.memory_space<vmem>>, vector<8x128xf32>
      %c0_11 = arith.constant 0 : index
      %c0_12 = arith.constant 0 : index
      %14 = vector.load %arg4[%c0_11, %c0_12] : memref<128x64xf32, #tpu.memory_space<vmem>>, vector<128x64xf32>
      %cst_13 = arith.constant dense<0.000000e+00> : vector<8x64xf32>
      %15 = tpu.matmul %13, %14, %cst_13 {dimension_numbers = #tpu.dot_dimension_numbers<[1], [0], [0], [1], [0, 0, 1, 1], [], []>} : vector<8x128xf32>, vector<128x64xf32>, vector<8x64xf32> -> vector<8x64xf32>
      %16 = arith.addf %12, %15 : vector<8x64xf32>
      %c0_14 = arith.constant 0 : index
      %c0_15 = arith.constant 0 : index
      %17 = vector.load %arg17[%c0_14, %c0_15] : memref<8x64xf32, #tpu.memory_space<vmem>>, vector<8x64xf32>
      tpu.vector_store %arg17[%c0_14, %c0_15], %16 {strides = array<i32>} : memref<8x64xf32, #tpu.memory_space<vmem>>, vector<8x64xf32>,
      %c0_16 = arith.constant 0 : index
      %c0_17 = arith.constant 0 : index
      %18 = vector.load %arg19[%c0_16, %c0_17] : memref<16x1xf32, #tpu.memory_space<vmem>>, vector<16x1xf32>
      %cst_18 = arith.constant dense<0xFF800000> : vector<16xf32>
      %19 = vector.multi_reduction <maximumf>, %2, %cst_18 [1] : vector<16x128xf32> to vector<16xf32>
      %20 = vector.shape_cast %19 : vector<16xf32> to vector<16x1xf32>
      %21 = arith.maximumf %18, %20 : vector<16x1xf32>
      %c0_19 = arith.constant 0 : index
      %c0_20 = arith.constant 0 : index
      %22 = vector.load %arg20[%c0_19, %c0_20] : memref<16x1xf32, #tpu.memory_space<vmem>>, vector<16x1xf32>
      %23 = arith.subf %18, %21 : vector<16x1xf32>
      %24 = math.exp %23 : vector<16x1xf32>
      %25 = arith.mulf %22, %24 : vector<16x1xf32>
      %26 = vector.broadcast %21 : vector<16x1xf32> to vector<16x128xf32>
      %27 = arith.subf %2, %26 : vector<16x128xf32>
      %28 = math.exp %27 : vector<16x128xf32>
      %cst_21 = arith.constant dense<0.000000e+00> : vector<16xf32>
      %29 = vector.multi_reduction <add>, %28, %cst_21 [1] : vector<16x128xf32> to vector<16xf32>
      %30 = vector.shape_cast %29 : vector<16xf32> to vector<16x1xf32>
      %31 = arith.addf %25, %30 : vector<16x1xf32>
      %c0_22 = arith.constant 0 : index
      %c0_23 = arith.constant 0 : index
      %32 = vector.load %arg20[%c0_22, %c0_23] : memref<16x1xf32, #tpu.memory_space<vmem>>, vector<16x1xf32>
      tpu.vector_store %arg20[%c0_22, %c0_23], %31 {strides = array<i32>} : memref<16x1xf32, #tpu.memory_space<vmem>>, vector<16x1xf32>,
      %c0_24 = arith.constant 0 : index
      %c0_25 = arith.constant 0 : index
      %33 = vector.load %arg19[%c0_24, %c0_25] : memref<16x1xf32, #tpu.memory_space<vmem>>, vector<16x1xf32>
      tpu.vector_store %arg19[%c0_24, %c0_25], %21 {strides = array<i32>} : memref<16x1xf32, #tpu.memory_space<vmem>>, vector<16x1xf32>,
      %c1_i32_26 = arith.constant 1 : i32
      %34 = arith.cmpi eq, %arg1, %c1_i32_26 : i32
      %35 = arith.extui %34 : i1 to i32
      %c0_i32_27 = arith.constant 0 : i32
      %36 = arith.cmpi ne, %35, %c0_i32_27 : i32
      scf.if %36 {
        %c0_28 = arith.constant 0 : index
        %c0_29 = arith.constant 0 : index
        %37 = vector.load %arg17[%c0_28, %c0_29] : memref<8x64xf32, #tpu.memory_space<vmem>>, vector<8x64xf32>
        %c0_30 = arith.constant 0 : index
        %c0_31 = arith.constant 0 : index
        %38 = vector.load %arg7[%c0_30, %c0_31] : memref<1x64xf32, #tpu.memory_space<vmem>>, vector<1x64xf32>
        %39 = vector.broadcast %38 : vector<1x64xf32> to vector<8x64xf32>
        %40 = arith.addf %37, %39 : vector<8x64xf32>
        %41 = math.tanh %40 : vector<8x64xf32>
        %c0_32 = arith.constant 0 : index
        %c0_33 = arith.constant 0 : index
        %42 = vector.load %arg8[%c0_32, %c0_33] : memref<64x64xf32, #tpu.memory_space<vmem>>, vector<64x64xf32>
        %cst_34 = arith.constant dense<0.000000e+00> : vector<8x64xf32>
        %43 = tpu.matmul %41, %42, %cst_34 {dimension_numbers = #tpu.dot_dimension_numbers<[1], [0], [0], [1], [0, 0, 1, 1], [], []>} : vector<8x64xf32>, vector<64x64xf32>, vector<8x64xf32> -> vector<8x64xf32>
        %c0_35 = arith.constant 0 : index
        %c0_36 = arith.constant 0 : index
        %44 = vector.load %arg9[%c0_35, %c0_36] : memref<1x64xf32, #tpu.memory_space<vmem>>, vector<1x64xf32>
        %45 = vector.broadcast %44 : vector<1x64xf32> to vector<8x64xf32>
        %46 = arith.addf %43, %45 : vector<8x64xf32>
        %47 = math.tanh %46 : vector<8x64xf32>
        %c0_37 = arith.constant 0 : index
        %c0_38 = arith.constant 0 : index
        %48 = vector.load %arg10[%c0_37, %c0_38] : memref<64x16xf32, #tpu.memory_space<vmem>>, vector<64x16xf32>
        %cst_39 = arith.constant dense<0.000000e+00> : vector<8x16xf32>
        %49 = tpu.matmul %47, %48, %cst_39 {dimension_numbers = #tpu.dot_dimension_numbers<[1], [0], [0], [1], [0, 0, 1, 1], [], []>} : vector<8x64xf32>, vector<64x16xf32>, vector<8x16xf32> -> vector<8x16xf32>
        %c0_40 = arith.constant 0 : index
        %c0_41 = arith.constant 0 : index
        %50 = vector.load %arg11[%c0_40, %c0_41] : memref<1x16xf32, #tpu.memory_space<vmem>>, vector<1x16xf32>
        %51 = vector.broadcast %50 : vector<1x16xf32> to vector<8x16xf32>
        %52 = arith.addf %49, %51 : vector<8x16xf32>
        %c0_42 = arith.constant 0 : index
        %c0_43 = arith.constant 0 : index
        %53 = vector.load %arg12[%c0_42, %c0_43] : memref<64x16xf32, #tpu.memory_space<vmem>>, vector<64x16xf32>
        %cst_44 = arith.constant dense<0.000000e+00> : vector<8x16xf32>
        %54 = tpu.matmul %47, %53, %cst_44 {dimension_numbers = #tpu.dot_dimension_numbers<[1], [0], [0], [1], [0, 0, 1, 1], [], []>} : vector<8x64xf32>, vector<64x16xf32>, vector<8x16xf32> -> vector<8x16xf32>
        %c0_45 = arith.constant 0 : index
        %c0_46 = arith.constant 0 : index
        %55 = vector.load %arg13[%c0_45, %c0_46] : memref<1x16xf32, #tpu.memory_space<vmem>>, vector<1x16xf32>
        %56 = vector.broadcast %55 : vector<1x16xf32> to vector<8x16xf32>
        %57 = arith.addf %54, %56 : vector<8x16xf32>
        %cst_47 = arith.constant 1.000000e+00 : f32
        %58 = vector.broadcast %cst_47 : f32 to vector<8x16xf32>
        %59 = arith.addf %58, %57 : vector<8x16xf32>
        %60 = arith.mulf %52, %52 : vector<8x16xf32>
        %61 = arith.subf %59, %60 : vector<8x16xf32>
        %62 = math.exp %57 : vector<8x16xf32>
        %63 = arith.subf %61, %62 : vector<8x16xf32>
        %cst_48 = arith.constant dense<0.000000e+00> : vector<8xf32>
        %64 = vector.multi_reduction <add>, %63, %cst_48 [1] : vector<8x16xf32> to vector<8xf32>
        %65 = vector.shape_cast %64 : vector<8xf32> to vector<8x1xf32>
        %cst_49 = arith.constant -5.000000e-01 : f32
        %66 = vector.broadcast %cst_49 : f32 to vector<8x1xf32>
        %67 = arith.mulf %66, %65 : vector<8x1xf32>
        %cst_50 = arith.constant dense<0.000000e+00> : vector<1xf32>
        %68 = vector.multi_reduction <add>, %67, %cst_50 [0] : vector<8x1xf32> to vector<1xf32>
        %69 = vector.shape_cast %68 : vector<1xf32> to vector<1x1xf32>
        %cst_51 = arith.constant 8.000000e+00 : f32
        %70 = vector.broadcast %cst_51 : f32 to vector<1x1xf32>
        %71 = arith.divf %69, %70 : vector<1x1xf32>
        %c0_52 = arith.constant 0 : index
        %c0_53 = arith.constant 0 : index
        %72 = vector.load %arg16[%c0_52, %c0_53] : memref<1x1xf32, #tpu.memory_space<vmem>>, vector<1x1xf32>
        tpu.vector_store %arg16[%c0_52, %c0_53], %71 {strides = array<i32>} : memref<1x1xf32, #tpu.memory_space<vmem>>, vector<1x1xf32>,
        %c0_54 = arith.constant 0 : index
        %c0_55 = arith.constant 0 : index
        %73 = vector.load %arg14[%c0_54, %c0_55] : memref<8x16xf32, #tpu.memory_space<vmem>>, vector<8x16xf32>
        %cst_56 = arith.constant 5.000000e-01 : f32
        %74 = vector.broadcast %cst_56 : f32 to vector<8x16xf32>
        %75 = arith.mulf %74, %57 : vector<8x16xf32>
        %76 = math.exp %75 : vector<8x16xf32>
        %77 = arith.mulf %73, %76 : vector<8x16xf32>
        %78 = arith.addf %77, %52 : vector<8x16xf32>
        %cst_57 = arith.constant dense<0xFF800000> : vector<8xf32>
        %79 = vector.multi_reduction <maximumf>, %78, %cst_57 [1] : vector<8x16xf32> to vector<8xf32>
        %80 = vector.shape_cast %79 : vector<8xf32> to vector<8x1xf32>
        %81 = vector.broadcast %80 : vector<8x1xf32> to vector<8x16xf32>
        %82 = arith.subf %78, %81 : vector<8x16xf32>
        %83 = math.exp %82 : vector<8x16xf32>
        %cst_58 = arith.constant dense<0.000000e+00> : vector<8xf32>
        %84 = vector.multi_reduction <add>, %83, %cst_58 [1] : vector<8x16xf32> to vector<8xf32>
        %85 = vector.shape_cast %84 : vector<8xf32> to vector<8x1xf32>
        %86 = tpu.reciprocal %85 {approx = true} : vector<8x1xf32> -> vector<8x1xf32>
        %87 = vector.broadcast %86 : vector<8x1xf32> to vector<8x16xf32>
        %88 = arith.mulf %83, %87 : vector<8x16xf32>
        %c0_59 = arith.constant 0 : index
        %c0_60 = arith.constant 0 : index
        %89 = vector.load %arg18[%c0_59, %c0_60] : memref<8x16xf32, #tpu.memory_space<vmem>>, vector<8x16xf32>
        tpu.vector_store %arg18[%c0_59, %c0_60], %88 {strides = array<i32>} : memref<8x16xf32, #tpu.memory_space<vmem>>, vector<8x16xf32>,
        %c0_61 = arith.constant 0 : index
        %c0_62 = arith.constant 0 : index
        %90 = vector.load %arg20[%c0_61, %c0_62] : memref<16x1xf32, #tpu.memory_space<vmem>>, vector<16x1xf32>
        %91 = tpu.reciprocal %90 {approx = true} : vector<16x1xf32> -> vector<16x1xf32>
        %c0_63 = arith.constant 0 : index
        %c0_64 = arith.constant 0 : index
        %92 = vector.load %arg20[%c0_63, %c0_64] : memref<16x1xf32, #tpu.memory_space<vmem>>, vector<16x1xf32>
        tpu.vector_store %arg20[%c0_63, %c0_64], %91 {strides = array<i32>} : memref<16x1xf32, #tpu.memory_space<vmem>>, vector<16x1xf32>,
      } else {
      }
    } else {
    }
    %c1_i32 = arith.constant 1 : i32
    %6 = arith.cmpi eq, %arg0, %c1_i32 : i32
    %7 = arith.extui %6 : i1 to i32
    %c0_i32_4 = arith.constant 0 : i32
    %8 = arith.cmpi ne, %7, %c0_i32_4 : i32
    scf.if %8 {
      %c0_5 = arith.constant 0 : index
      %c0_6 = arith.constant 0 : index
      %9 = vector.load %arg19[%c0_5, %c0_6] : memref<16x1xf32, #tpu.memory_space<vmem>>, vector<16x1xf32>
      %10 = vector.broadcast %9 : vector<16x1xf32> to vector<16x128xf32>
      %11 = arith.subf %2, %10 : vector<16x128xf32>
      %12 = math.exp %11 : vector<16x128xf32>
      %c0_7 = arith.constant 0 : index
      %c0_8 = arith.constant 0 : index
      %13 = vector.load %arg20[%c0_7, %c0_8] : memref<16x1xf32, #tpu.memory_space<vmem>>, vector<16x1xf32>
      %14 = vector.broadcast %13 : vector<16x1xf32> to vector<16x128xf32>
      %15 = arith.mulf %12, %14 : vector<16x128xf32>
      %c0_9 = arith.constant 0 : index
      %c0_10 = arith.constant 0 : index
      %16 = vector.load %arg18[%c0_9, %c0_10] : memref<8x16xf32, #tpu.memory_space<vmem>>, vector<8x16xf32>
      %cst_11 = arith.constant dense<0.000000e+00> : vector<8x128xf32>
      %17 = tpu.matmul %16, %15, %cst_11 {dimension_numbers = #tpu.dot_dimension_numbers<[1], [0], [0], [1], [0, 0, 1, 1], [], []>} : vector<8x16xf32>, vector<16x128xf32>, vector<8x128xf32> -> vector<8x128xf32>
      %c0_12 = arith.constant 0 : index
      %c0_13 = arith.constant 0 : index
      %18 = vector.load %arg3[%c0_12, %c0_13] : memref<8x128xf32, #tpu.memory_space<vmem>>, vector<8x128xf32>
      %cst_14 = arith.constant 9.99999997E-7 : f32
      %19 = vector.broadcast %cst_14 : f32 to vector<8x128xf32>
      %20 = arith.addf %17, %19 : vector<8x128xf32>
      %21 = math.log %20 : vector<8x128xf32>
      %22 = arith.mulf %18, %21 : vector<8x128xf32>
      %cst_15 = arith.constant dense<0.000000e+00> : vector<8xf32>
      %23 = vector.multi_reduction <add>, %22, %cst_15 [1] : vector<8x128xf32> to vector<8xf32>
      %24 = vector.shape_cast %23 : vector<8xf32> to vector<8x1xf32>
      %c0_16 = arith.constant 0 : index
      %c0_17 = arith.constant 0 : index
      %25 = vector.load %arg21[%c0_16, %c0_17] : memref<1x1xf32, #tpu.memory_space<vmem>>, vector<1x1xf32>
      %cst_18 = arith.constant dense<0.000000e+00> : vector<1xf32>
      %26 = vector.multi_reduction <add>, %24, %cst_18 [0] : vector<8x1xf32> to vector<1xf32>
      %27 = vector.shape_cast %26 : vector<1xf32> to vector<1x1xf32>
      %28 = arith.addf %25, %27 : vector<1x1xf32>
      %c0_19 = arith.constant 0 : index
      %c0_20 = arith.constant 0 : index
      %29 = vector.load %arg21[%c0_19, %c0_20] : memref<1x1xf32, #tpu.memory_space<vmem>>, vector<1x1xf32>
      tpu.vector_store %arg21[%c0_19, %c0_20], %28 {strides = array<i32>} : memref<1x1xf32, #tpu.memory_space<vmem>>, vector<1x1xf32>,
      %c1_i32_21 = arith.constant 1 : i32
      %30 = arith.cmpi eq, %arg1, %c1_i32_21 : i32
      %31 = arith.extui %30 : i1 to i32
      %c0_i32_22 = arith.constant 0 : i32
      %32 = arith.cmpi ne, %31, %c0_i32_22 : i32
      scf.if %32 {
        %c0_23 = arith.constant 0 : index
        %c0_24 = arith.constant 0 : index
        %33 = vector.load %arg21[%c0_23, %c0_24] : memref<1x1xf32, #tpu.memory_space<vmem>>, vector<1x1xf32>
        %cst_25 = arith.constant 0.000000e+00 : f32
        %34 = vector.broadcast %cst_25 : f32 to vector<1x1xf32>
        %35 = arith.subf %34, %33 : vector<1x1xf32>
        %cst_26 = arith.constant 1.250000e-01 : f32
        %36 = vector.broadcast %cst_26 : f32 to vector<1x1xf32>
        %37 = arith.mulf %35, %36 : vector<1x1xf32>
        %c0_27 = arith.constant 0 : index
        %c0_28 = arith.constant 0 : index
        %38 = vector.load %arg15[%c0_27, %c0_28] : memref<1x1xf32, #tpu.memory_space<vmem>>, vector<1x1xf32>
        tpu.vector_store %arg15[%c0_27, %c0_28], %37 {strides = array<i32>} : memref<1x1xf32, #tpu.memory_space<vmem>>, vector<1x1xf32>,
      } else {
      }
    } else {
    }
    return
  }
  func.func @transform_0(%arg0: i32, %arg1: i32) -> (i32, i32) {
    %c1_i32 = arith.constant 1 : i32
    %0 = arith.subi %c1_i32, %arg0 : i32
    %1 = arith.muli %arg1, %0 : i32
    %c0_i32 = arith.constant 0 : i32
    %c0_i32_0 = arith.constant 0 : i32
    return %c0_i32, %1 : i32, i32
  }
  func.func @transform_1(%arg0: i32, %arg1: i32) -> (i32, i32) {
    %0 = arith.muli %arg1, %arg0 : i32
    %c0_i32 = arith.constant 0 : i32
    %c0_i32_0 = arith.constant 0 : i32
    return %c0_i32, %0 : i32, i32
  }
  func.func @transform_2(%arg0: i32, %arg1: i32) -> (i32, i32) {
    %c1_i32 = arith.constant 1 : i32
    %0 = arith.subi %c1_i32, %arg0 : i32
    %1 = arith.muli %arg1, %0 : i32
    %c0_i32 = arith.constant 0 : i32
    %c0_i32_0 = arith.constant 0 : i32
    return %1, %c0_i32 : i32, i32
  }
  func.func @transform_3(%arg0: i32, %arg1: i32) -> (i32, i32) {
    %c0_i32 = arith.constant 0 : i32
    %c0_i32_0 = arith.constant 0 : i32
    return %arg1, %c0_i32 : i32, i32
  }
  func.func @transform_4(%arg0: i32, %arg1: i32) -> (i32, i32) {
    %c0_i32 = arith.constant 0 : i32
    %c0_i32_0 = arith.constant 0 : i32
    %c0_i32_1 = arith.constant 0 : i32
    return %c0_i32, %c0_i32_0 : i32, i32
  }
  func.func @transform_5(%arg0: i32, %arg1: i32) -> (i32, i32) {
    %c0_i32 = arith.constant 0 : i32
    %c0_i32_0 = arith.constant 0 : i32
    %c0_i32_1 = arith.constant 0 : i32
    return %c0_i32, %c0_i32_0 : i32, i32
  }
  func.func @transform_6(%arg0: i32, %arg1: i32) -> (i32, i32) {
    %c0_i32 = arith.constant 0 : i32
    %c0_i32_0 = arith.constant 0 : i32
    %c0_i32_1 = arith.constant 0 : i32
    return %c0_i32, %c0_i32_0 : i32, i32
  }
  func.func @transform_7(%arg0: i32, %arg1: i32) -> (i32, i32) {
    %c0_i32 = arith.constant 0 : i32
    %c0_i32_0 = arith.constant 0 : i32
    %c0_i32_1 = arith.constant 0 : i32
    return %c0_i32, %c0_i32_0 : i32, i32
  }
  func.func @transform_8(%arg0: i32, %arg1: i32) -> (i32, i32) {
    %c0_i32 = arith.constant 0 : i32
    %c0_i32_0 = arith.constant 0 : i32
    %c0_i32_1 = arith.constant 0 : i32
    return %c0_i32, %c0_i32_0 : i32, i32
  }
  func.func @transform_9(%arg0: i32, %arg1: i32) -> (i32, i32) {
    %c0_i32 = arith.constant 0 : i32
    %c0_i32_0 = arith.constant 0 : i32
    %c0_i32_1 = arith.constant 0 : i32
    return %c0_i32, %c0_i32_0 : i32, i32
  }
  func.func @transform_10(%arg0: i32, %arg1: i32) -> (i32, i32) {
    %c0_i32 = arith.constant 0 : i32
    %c0_i32_0 = arith.constant 0 : i32
    %c0_i32_1 = arith.constant 0 : i32
    return %c0_i32, %c0_i32_0 : i32, i32
  }
  func.func @transform_11(%arg0: i32, %arg1: i32) -> (i32, i32) {
    %c0_i32 = arith.constant 0 : i32
    %c0_i32_0 = arith.constant 0 : i32
    %c0_i32_1 = arith.constant 0 : i32
    return %c0_i32, %c0_i32_0 : i32, i32
  }
  func.func @transform_12(%arg0: i32, %arg1: i32) -> (i32, i32) {
    %c0_i32 = arith.constant 0 : i32
    %c0_i32_0 = arith.constant 0 : i32
    %c0_i32_1 = arith.constant 0 : i32
    return %c0_i32, %c0_i32_0 : i32, i32
  }
  func.func @transform_13(%arg0: i32, %arg1: i32) -> (i32, i32) {
    %c0_i32 = arith.constant 0 : i32
    %c0_i32_0 = arith.constant 0 : i32
    %c0_i32_1 = arith.constant 0 : i32
    return %c0_i32, %c0_i32_0 : i32, i32
  }
  func.func @transform_14(%arg0: i32, %arg1: i32) -> (i32, i32) {
    %c0_i32 = arith.constant 0 : i32
    %c0_i32_0 = arith.constant 0 : i32
    %c0_i32_1 = arith.constant 0 : i32
    return %c0_i32, %c0_i32_0 : i32, i32
  }
}

</mosaic_0001>

<llo_original>
// kernel: etm_forward.1
$region0: #{etm_forward.1}
  #allocation0 [shape = 'u32[]', space=smem, size = 0x4, offset = 0x4, fixed_abs, tag = 'smem constant byte address 0x4 - core index']
  #allocation1 [shape = 'u32[72,128]{1,0:T(1,128)}', space=vmem, size = 0x9000, scoped, tag = 'internal scratch']
  #allocation2 [shape = 'f32[8,64]{1,0:T(8,128)}', space=vmem, size = 0x1000, scoped, tag = 'scratch operand']
  #allocation3 [shape = 'f32[8,16]{1,0:T(8,128)}', space=vmem, size = 0x1000, scoped, tag = 'scratch operand']
  #allocation4 [shape = 'f32[16,1]{1,0:T(8,128)}', space=vmem, size = 0x2000, scoped, tag = 'scratch operand']
  #allocation5 [shape = 'f32[16,1]{1,0:T(8,128)}', space=vmem, size = 0x2000, scoped, tag = 'scratch operand']
  #allocation6 [shape = 'f32[1,1]{1,0:T(1,128)}', space=vmem, size = 0x200, scoped, tag = 'scratch operand']
  %s0 = inlined_call_operand.vmem [shape: f32[8,256], index: 0, kind: input, shape index: {}]
  %s1 = inlined_call_operand.vmem [shape: f32[8,256], index: 1, kind: input, shape index: {}]
  %s2 = inlined_call_operand.vmem [shape: f32[256,64], index: 2, kind: input, shape index: {}]
  %s3 = inlined_call_operand.vmem [shape: f32[256,64], index: 3, kind: input, shape index: {}]
  %s4 = inlined_call_operand.vmem [shape: f32[16,64], index: 4, kind: input, shape index: {}]
  %s5 = inlined_call_operand.vmem [shape: f32[1,64], index: 5, kind: input, shape index: {}]
  %s6 = inlined_call_operand.vmem [shape: f32[64,64], index: 6, kind: input, shape index: {}]
  %s7 = inlined_call_operand.vmem [shape: f32[1,64], index: 7, kind: input, shape index: {}]
  %s8 = inlined_call_operand.vmem [shape: f32[64,16], index: 8, kind: input, shape index: {}]
  %s9 = inlined_call_operand.vmem [shape: f32[1,16], index: 9, kind: input, shape index: {}]
  %s10 = inlined_call_operand.vmem [shape: f32[64,16], index: 10, kind: input, shape index: {}]
  %s11 = inlined_call_operand.vmem [shape: f32[1,16], index: 11, kind: input, shape index: {}]
  %s12 = inlined_call_operand.vmem [shape: f32[8,16], index: 12, kind: input, shape index: {}]
  %s13 = inlined_call_operand.hbm [shape: f32[1,1], index: 13, kind: output, shape index: {0}]
  %s14 = inlined_call_operand.hbm [shape: f32[1,1], index: 14, kind: output, shape index: {1}]
  %15 = xla_tuple %s13, %s14
  %s16 = sld [smem:[#allocation0]]
  $region113: #{etm_forward.1} parent=0
    _
  %s18 = ssub.s32 1, %s16
  %s19 = scalar_select 0, %s18, %s16
  $region1: #{etm_forward.1} parent=0
    #allocation7 [shape = 'u8[512]{0}', space=vmem, size = 0x400, scoped, tag = 'output window, operand 0, single buffered']
    #allocation8 [shape = 's32[2]{0}', space=sflag, size = 0x8, scoped, tag = 'scoped memory for etm_forward.1']
    #allocation9 [shape = 'u8[512]{0}', space=vmem, size = 0x400, scoped, tag = 'output window, operand 1, single buffered']
    #allocation10 [shape = 's32[1]{0}', space=sflag, size = 0x4, scoped, tag = 'scoped memory for etm_forward.1']
    %20 = vsyncpa [#allocation8], 0
    %21 = vsyncpa [#allocation10], 0
    loop: start=0, step=1, limit=6
    $region2: #{etm_forward.1} parent=1 // loop_pre_header
      _
    $region3: #{etm_forward.1} parent=1 // loop_header
      %s23 = sphi 0, %s27
      %p24 = scmp.ge.s32.totalorder %s23, 6
      %s30 = sphi 0, %s42
      %s31 = sphi 0, %s38
      %s32 = sphi 0, %s30
      %s33 = sphi 0, %s31
      %s34 = sphi 0, %s32
      %s35 = sphi 0, %s33
      %s49 = sphi 0, %s51
      %s52 = sphi 0, %s49
      %s53 = sphi 0, %s52
      %s69 = sphi 0, %s53
      %s77 = sphi 0, %s79
      %s80 = sphi 0, %s77
      %s81 = sphi 0, %s80
      %s97 = sphi 0, %s81
      %s107 = sphi 0, %s109
      %s110 = sphi 0, %s107
      %s111 = sphi 0, %s110
      %s127 = sphi 0, %s111
      %s133 = sphi 0, %s135
      %s136 = sphi 0, %s133
      %s137 = sphi 0, %s136
      %s153 = sphi 0, %s137
      %s157 = sphi 0, %s157
      %s159 = sphi 0, %s157
      %s160 = sphi 0, %s159
      %s174 = sphi 0, %s160
      %s178 = sphi 0, %s178
      %s180 = sphi 0, %s178
      %s181 = sphi 0, %s180
      %s195 = sphi 0, %s181
      %s199 = sphi 0, %s199
      %s201 = sphi 0, %s199
      %s202 = sphi 0, %s201
      %s216 = sphi 0, %s202
      %s220 = sphi 0, %s220
      %s222 = sphi 0, %s220
      %s223 = sphi 0, %s222
      %s237 = sphi 0, %s223
      %s241 = sphi 0, %s241
      %s243 = sphi 0, %s241
      %s244 = sphi 0, %s243
      %s258 = sphi 0, %s244
      %s262 = sphi 0, %s262
      %s264 = sphi 0, %s262
      %s265 = sphi 0, %s264
      %s279 = sphi 0, %s265
      %s283 = sphi 0, %s283
      %s285 = sphi 0, %s283
      %s286 = sphi 0, %s285
      %s300 = sphi 0, %s286
      %s304 = sphi 0, %s304
      %s306 = sphi 0, %s304
      %s307 = sphi 0, %s306
      %s321 = sphi 0, %s307
      %s325 = sphi 0, %s325
      %s327 = sphi 0, %s325
      %s328 = sphi 0, %s327
      %s342 = sphi 0, %s328
      %s346 = sphi 0, %s346
      %s348 = sphi 0, %s346
      %s349 = sphi 0, %s348
      %s363 = sphi 0, %s349
      %s367 = sphi 0, %s367
      %s369 = sphi 0, %s367
      %s370 = sphi 0, %s369
      %s384 = sphi 0, %s370
    $region4: #{etm_forward.1} parent=1 // loop_header_branch
      %26 = sbr.rel (%p24) target = $region8
    $region5: #{etm_forward.1} parent=1 // loop_body
      %s28 = ssub.s32 %s23, 1
      %s29 = ssub.s32 %s23, 2
      %s36 = sadd.s32 1, %s31
      %p37 = scmp.ge.s32.totalorder %s36, 2
      %s38 = scalar_select %p37, 0, %s36
      %s39 = sadd.s32 1, %s30
      %s40 = scalar_select %p37, %s39, %s30
      %p41 = scmp.ge.s32.totalorder %s40, 2
      %s42 = scalar_select %p41, 0, %s40
      %s43 = ssub.s32 1, %s30
      %s44 = smul.u32 %s31, %s43
      %s45 = ssub.s32 1, %s42
      %s46 = smul.u32 %s38, %s45
      %s47 = ssub.s32 %s44, %s46
      %p48 = scmp.eq.s32.totalorder %s47, 0
      %s50 = sadd.s32 %s49, 1
      %s51 = scalar_select %p48, %s49, %s50
      %p54 = pneg %p48
      %p55 = scmp.eq.s32.totalorder %s23, 3
      %p56 = por %p54, %p55
      %p57 = scmp.ne.s32.totalorder %s49, %s52
      %p58 = scmp.eq.s32.totalorder %s23, 0
      %p59 = por %p57, %p58
      %p60 = scmp.ne.s32.totalorder %s49, %s52
      %p61 = scmp.eq.s32.totalorder %s28, 3
      %p62 = por %p60, %p61
      %p63 = scmp.ne.s32.totalorder %s52, %s53
      %p64 = scmp.eq.s32.totalorder %s28, 0
      %p65 = por %p63, %p64
      %p66 = scmp.ne.s32.totalorder %s52, %s53
      %p67 = scmp.eq.s32.totalorder %s29, 3
      %p68 = por %p66, %p67
      %p70 = scmp.ne.s32.totalorder %s53, %s69
      %p71 = scmp.eq.s32.totalorder %s29, 0
      %p72 = por %p70, %p71
      %s73 = smul.u32 %s31, %s30
      %s74 = smul.u32 %s38, %s42
      %s75 = ssub.s32 %s73, %s74
      %p76 = scmp.eq.s32.totalorder %s75, 0
      %s78 = sadd.s32 %s77, 1
      %s79 = scalar_select %p76, %s77, %s78
      %p82 = pneg %p76
      %p83 = scmp.eq.s32.totalorder %s23, 3
      %p84 = por %p82, %p83
      %p85 = scmp.ne.s32.totalorder %s77, %s80
      %p86 = scmp.eq.s32.totalorder %s23, 0
      %p87 = por %p85, %p86
      %p88 = scmp.ne.s32.totalorder %s77, %s80
      %p89 = scmp.eq.s32.totalorder %s28, 3
      %p90 = por %p88, %p89
      %p91 = scmp.ne.s32.totalorder %s80, %s81
      %p92 = scmp.eq.s32.totalorder %s28, 0
      %p93 = por %p91, %p92
      %p94 = scmp.ne.s32.totalorder %s80, %s81
      %p95 = scmp.eq.s32.totalorder %s29, 3
      %p96 = por %p94, %p95
      %p98 = scmp.ne.s32.totalorder %s81, %s97
      %p99 = scmp.eq.s32.totalorder %s29, 0
      %p100 = por %p98, %p99
      %s101 = ssub.s32 1, %s30
      %s102 = smul.u32 %s31, %s101
      %s103 = ssub.s32 1, %s42
      %s104 = smul.u32 %s38, %s103
      %s105 = ssub.s32 %s102, %s104
      %p106 = scmp.eq.s32.totalorder %s105, 0
      %s108 = sadd.s32 %s107, 1
      %s109 = scalar_select %p106, %s107, %s108
      %p112 = pneg %p106
      %p113 = scmp.eq.s32.totalorder %s23, 3
      %p114 = por %p112, %p113
      %p115 = scmp.ne.s32.totalorder %s107, %s110
      %p116 = scmp.eq.s32.totalorder %s23, 0
      %p117 = por %p115, %p116
      %p118 = scmp.ne.s32.totalorder %s107, %s110
      %p119 = scmp.eq.s32.totalorder %s28, 3
      %p120 = por %p118, %p119
      %p121 = scmp.ne.s32.totalorder %s110, %s111
      %p122 = scmp.eq.s32.totalorder %s28, 0
      %p123 = por %p121, %p122
      %p124 = scmp.ne.s32.totalorder %s110, %s111
      %p125 = scmp.eq.s32.totalorder %s29, 3
      %p126 = por %p124, %p125
      %p128 = scmp.ne.s32.totalorder %s111, %s127
      %p129 = scmp.eq.s32.totalorder %s29, 0
      %p130 = por %p128, %p129
      %s131 = ssub.s32 %s31, %s38
      %p132 = scmp.eq.s32.totalorder %s131, 0
      %s134 = sadd.s32 %s133, 1
      %s135 = scalar_select %p132, %s133, %s134
      %p138 = pneg %p132
      %p139 = scmp.eq.s32.totalorder %s23, 3
      %p140 = por %p138, %p139
      %p141 = scmp.ne.s32.totalorder %s133, %s136
      %p142 = scmp.eq.s32.totalorder %s23, 0
      %p143 = por %p141, %p142
      %p144 = scmp.ne.s32.totalorder %s133, %s136
      %p145 = scmp.eq.s32.totalorder %s28, 3
      %p146 = por %p144, %p145
      %p147 = scmp.ne.s32.totalorder %s136, %s137
      %p148 = scmp.eq.s32.totalorder %s28, 0
      %p149 = por %p147, %p148
      %p150 = scmp.ne.s32.totalorder %s136, %s137
      %p151 = scmp.eq.s32.totalorder %s29, 3
      %p152 = por %p150, %p151
      %p154 = scmp.ne.s32.totalorder %s137, %s153
      %p155 = scmp.eq.s32.totalorder %s29, 0
      %p156 = por %p154, %p155
      %s158 = sadd.s32 %s157, 1
      %p161 = scmp.eq.s32.totalorder %s23, 3
      %p162 = scmp.ne.s32.totalorder %s157, %s159
      %p163 = scmp.eq.s32.totalorder %s23, 0
      %p164 = por %p162, %p163
      %p165 = scmp.ne.s32.totalorder %s157, %s159
      %p166 = scmp.eq.s32.totalorder %s28, 3
      %p167 = por %p165, %p166
      %p168 = scmp.ne.s32.totalorder %s159, %s160
      %p169 = scmp.eq.s32.totalorder %s28, 0
      %p170 = por %p168, %p169
      %p171 = scmp.ne.s32.totalorder %s159, %s160
      %p172 = scmp.eq.s32.totalorder %s29, 3
      %p173 = por %p171, %p172
      %p175 = scmp.ne.s32.totalorder %s160, %s174
      %p176 = scmp.eq.s32.totalorder %s29, 0
      %p177 = por %p175, %p176
      %s179 = sadd.s32 %s178, 1
      %p182 = scmp.eq.s32.totalorder %s23, 3
      %p183 = scmp.ne.s32.totalorder %s178, %s180
      %p184 = scmp.eq.s32.totalorder %s23, 0
      %p185 = por %p183, %p184
      %p186 = scmp.ne.s32.totalorder %s178, %s180
      %p187 = scmp.eq.s32.totalorder %s28, 3
      %p188 = por %p186, %p187
      %p189 = scmp.ne.s32.totalorder %s180, %s181
      %p190 = scmp.eq.s32.totalorder %s28, 0
      %p191 = por %p189, %p190
      %p192 = scmp.ne.s32.totalorder %s180, %s181
      %p193 = scmp.eq.s32.totalorder %s29, 3
      %p194 = por %p192, %p193
      %p196 = scmp.ne.s32.totalorder %s181, %s195
      %p197 = scmp.eq.s32.totalorder %s29, 0
      %p198 = por %p196, %p197
      %s200 = sadd.s32 %s199, 1
      %p203 = scmp.eq.s32.totalorder %s23, 3
      %p204 = scmp.ne.s32.totalorder %s199, %s201
      %p205 = scmp.eq.s32.totalorder %s23, 0
      %p206 = por %p204, %p205
      %p207 = scmp.ne.s32.totalorder %s199, %s201
      %p208 = scmp.eq.s32.totalorder %s28, 3
      %p209 = por %p207, %p208
      %p210 = scmp.ne.s32.totalorder %s201, %s202
      %p211 = scmp.eq.s32.totalorder %s28, 0
      %p212 = por %p210, %p211
      %p213 = scmp.ne.s32.totalorder %s201, %s202
      %p214 = scmp.eq.s32.totalorder %s29, 3
      %p215 = por %p213, %p214
      %p217 = scmp.ne.s32.totalorder %s202, %s216
      %p218 = scmp.eq.s32.totalorder %s29, 0
      %p219 = por %p217, %p218
      %s221 = sadd.s32 %s220, 1
      %p224 = scmp.eq.s32.totalorder %s23, 3
      %p225 = scmp.ne.s32.totalorder %s220, %s222
      %p226 = scmp.eq.s32.totalorder %s23, 0
      %p227 = por %p225, %p226
      %p228 = scmp.ne.s32.totalorder %s220, %s222
      %p229 = scmp.eq.s32.totalorder %s28, 3
      %p230 = por %p228, %p229
      %p231 = scmp.ne.s32.totalorder %s222, %s223
      %p232 = scmp.eq.s32.totalorder %s28, 0
      %p233 = por %p231, %p232
      %p234 = scmp.ne.s32.totalorder %s222, %s223
      %p235 = scmp.eq.s32.totalorder %s29, 3
      %p236 = por %p234, %p235
      %p238 = scmp.ne.s32.totalorder %s223, %s237
      %p239 = scmp.eq.s32.totalorder %s29, 0
      %p240 = por %p238, %p239
      %s242 = sadd.s32 %s241, 1
      %p245 = scmp.eq.s32.totalorder %s23, 3
      %p246 = scmp.ne.s32.totalorder %s241, %s243
      %p247 = scmp.eq.s32.totalorder %s23, 0
      %p248 = por %p246, %p247
      %p249 = scmp.ne.s32.totalorder %s241, %s243
      %p250 = scmp.eq.s32.totalorder %s28, 3
      %p251 = por %p249, %p250
      %p252 = scmp.ne.s32.totalorder %s243, %s244
      %p253 = scmp.eq.s32.totalorder %s28, 0
      %p254 = por %p252, %p253
      %p255 = scmp.ne.s32.totalorder %s243, %s244
      %p256 = scmp.eq.s32.totalorder %s29, 3
      %p257 = por %p255, %p256
      %p259 = scmp.ne.s32.totalorder %s244, %s258
      %p260 = scmp.eq.s32.totalorder %s29, 0
      %p261 = por %p259, %p260
      %s263 = sadd.s32 %s262, 1
      %p266 = scmp.eq.s32.totalorder %s23, 3
      %p267 = scmp.ne.s32.totalorder %s262, %s264
      %p268 = scmp.eq.s32.totalorder %s23, 0
      %p269 = por %p267, %p268
      %p270 = scmp.ne.s32.totalorder %s262, %s264
      %p271 = scmp.eq.s32.totalorder %s28, 3
      %p272 = por %p270, %p271
      %p273 = scmp.ne.s32.totalorder %s264, %s265
      %p274 = scmp.eq.s32.totalorder %s28, 0
      %p275 = por %p273, %p274
      %p276 = scmp.ne.s32.totalorder %s264, %s265
      %p277 = scmp.eq.s32.totalorder %s29, 3
      %p278 = por %p276, %p277
      %p280 = scmp.ne.s32.totalorder %s265, %s279
      %p281 = scmp.eq.s32.totalorder %s29, 0
      %p282 = por %p280, %p281
      %s284 = sadd.s32 %s283, 1
      %p287 = scmp.eq.s32.totalorder %s23, 3
      %p288 = scmp.ne.s32.totalorder %s283, %s285
      %p289 = scmp.eq.s32.totalorder %s23, 0
      %p290 = por %p288, %p289
      %p291 = scmp.ne.s32.totalorder %s283, %s285
      %p292 = scmp.eq.s32.totalorder %s28, 3
      %p293 = por %p291, %p292
      %p294 = scmp.ne.s32.totalorder %s285, %s286
      %p295 = scmp.eq.s32.totalorder %s28, 0
      %p296 = por %p294, %p295
      %p297 = scmp.ne.s32.totalorder %s285, %s286
      %p298 = scmp.eq.s32.totalorder %s29, 3
      %p299 = por %p297, %p298
      %p301 = scmp.ne.s32.totalorder %s286, %s300
      %p302 = scmp.eq.s32.totalorder %s29, 0
      %p303 = por %p301, %p302
      %s305 = sadd.s32 %s304, 1
      %p308 = scmp.eq.s32.totalorder %s23, 3
      %p309 = scmp.ne.s32.totalorder %s304, %s306
      %p310 = scmp.eq.s32.totalorder %s23, 0
      %p311 = por %p309, %p310
      %p312 = scmp.ne.s32.totalorder %s304, %s306
      %p313 = scmp.eq.s32.totalorder %s28, 3
      %p314 = por %p312, %p313
      %p315 = scmp.ne.s32.totalorder %s306, %s307
      %p316 = scmp.eq.s32.totalorder %s28, 0
      %p317 = por %p315, %p316
      %p318 = scmp.ne.s32.totalorder %s306, %s307
      %p319 = scmp.eq.s32.totalorder %s29, 3
      %p320 = por %p318, %p319
      %p322 = scmp.ne.s32.totalorder %s307, %s321
      %p323 = scmp.eq.s32.totalorder %s29, 0
      %p324 = por %p322, %p323
      %s326 = sadd.s32 %s325, 1
      %p329 = scmp.eq.s32.totalorder %s23, 3
      %p330 = scmp.ne.s32.totalorder %s325, %s327
      %p331 = scmp.eq.s32.totalorder %s23, 0
      %p332 = por %p330, %p331
      %p333 = scmp.ne.s32.totalorder %s325, %s327
      %p334 = scmp.eq.s32.totalorder %s28, 3
      %p335 = por %p333, %p334
      %p336 = scmp.ne.s32.totalorder %s327, %s328
      %p337 = scmp.eq.s32.totalorder %s28, 0
      %p338 = por %p336, %p337
      %p339 = scmp.ne.s32.totalorder %s327, %s328
      %p340 = scmp.eq.s32.totalorder %s29, 3
      %p341 = por %p339, %p340
      %p343 = scmp.ne.s32.totalorder %s328, %s342
      %p344 = scmp.eq.s32.totalorder %s29, 0
      %p345 = por %p343, %p344
      %s347 = sadd.s32 %s346, 1
      %p350 = scmp.eq.s32.totalorder %s23, 3
      %p351 = scmp.ne.s32.totalorder %s346, %s348
      %p352 = scmp.eq.s32.totalorder %s23, 0
      %p353 = por %p351, %p352
      %p354 = scmp.ne.s32.totalorder %s346, %s348
      %p355 = scmp.eq.s32.totalorder %s28, 3
      %p356 = por %p354, %p355
      %p357 = scmp.ne.s32.totalorder %s348, %s349
      %p358 = scmp.eq.s32.totalorder %s28, 0
      %p359 = por %p357, %p358
      %p360 = scmp.ne.s32.totalorder %s348, %s349
      %p361 = scmp.eq.s32.totalorder %s29, 3
      %p362 = por %p360, %p361
      %p364 = scmp.ne.s32.totalorder %s349, %s363
      %p365 = scmp.eq.s32.totalorder %s29, 0
      %p366 = por %p364, %p365
      %s368 = sadd.s32 %s367, 1
      %p371 = scmp.eq.s32.totalorder %s23, 3
      %p372 = scmp.ne.s32.totalorder %s367, %s369
      %p373 = scmp.eq.s32.totalorder %s23, 0
      %p374 = por %p372, %p373
      %p375 = scmp.ne.s32.totalorder %s367, %s369
      %p376 = scmp.eq.s32.totalorder %s28, 3
      %p377 = por %p375, %p376
      %p378 = scmp.ne.s32.totalorder %s369, %s370
      %p379 = scmp.eq.s32.totalorder %s28, 0
      %p380 = por %p378, %p379
      %p381 = scmp.ne.s32.totalorder %s369, %s370
      %p382 = scmp.eq.s32.totalorder %s29, 3
      %p383 = por %p381, %p382
      %p385 = scmp.ne.s32.totalorder %s370, %s384
      %p386 = scmp.eq.s32.totalorder %s29, 0
      %p387 = por %p385, %p386
      %p388 = scmp.le.s32.totalorder 1, %s23
      %p389 = scmp.lt.s32.totalorder %s23, 5
      %p390 = pnand %p388, %p389
      %p391 = pneg %p390
      // Predicated region
      $region9: #{etm_forward.1} parent=5 // pred_check
        _
      $region10: #{etm_forward.1} parent=5 // pred_check_branch
        %393 = sbr.rel (%p390) target = $region12
      $region11: #{etm_forward.1} parent=5 // pred_region
        %s394 = ssub.s32 %s23, 1
        // Predicated region
        $region13: #{etm_forward.1} parent=11 // pred_check
          %p395 = pneg %p170
        $region14: #{etm_forward.1} parent=11 // pred_check_branch
          %397 = sbr.rel (%p395) target = $region16
        $region15: #{etm_forward.1} parent=11 // pred_region
          _
        $region16: #{etm_forward.1} parent=11 // pred_fallthru
          _
        // Predicated region
        $region17: #{etm_forward.1} parent=11 // pred_check
          %p398 = pneg %p191
        $region18: #{etm_forward.1} parent=11 // pred_check_branch
          %400 = sbr.rel (%p398) target = $region20
        $region19: #{etm_forward.1} parent=11 // pred_region
          _
        $region20: #{etm_forward.1} parent=11 // pred_fallthru
          _
        // Predicated region
        $region21: #{etm_forward.1} parent=11 // pred_check
          %p401 = pneg %p212
        $region22: #{etm_forward.1} parent=11 // pred_check_branch
          %403 = sbr.rel (%p401) target = $region24
        $region23: #{etm_forward.1} parent=11 // pred_region
          _
        $region24: #{etm_forward.1} parent=11 // pred_fallthru
          _
        // Predicated region
        $region25: #{etm_forward.1} parent=11 // pred_check
          %p404 = pneg %p233
        $region26: #{etm_forward.1} parent=11 // pred_check_branch
          %406 = sbr.rel (%p404) target = $region28
        $region27: #{etm_forward.1} parent=11 // pred_region
          _
        $region28: #{etm_forward.1} parent=11 // pred_fallthru
          _
        // Predicated region
        $region29: #{etm_forward.1} parent=11 // pred_check
          %p407 = pneg %p254
        $region30: #{etm_forward.1} parent=11 // pred_check_branch
          %409 = sbr.rel (%p407) target = $region32
        $region31: #{etm_forward.1} parent=11 // pred_region
          _
        $region32: #{etm_forward.1} parent=11 // pred_fallthru
          _
        // Predicated region
        $region33: #{etm_forward.1} parent=11 // pred_check
          %p410 = pneg %p275
        $region34: #{etm_forward.1} parent=11 // pred_check_branch
          %412 = sbr.rel (%p410) target = $region36
        $region35: #{etm_forward.1} parent=11 // pred_region
          _
        $region36: #{etm_forward.1} parent=11 // pred_fallthru
          _
        // Predicated region
        $region37: #{etm_forward.1} parent=11 // pred_check
          %p413 = pneg %p296
        $region38: #{etm_forward.1} parent=11 // pred_check_branch
          %415 = sbr.rel (%p413) target = $region40
        $region39: #{etm_forward.1} parent=11 // pred_region
          _
        $region40: #{etm_forward.1} parent=11 // pred_fallthru
          _
        // Predicated region
        $region41: #{etm_forward.1} parent=11 // pred_check
          %p416 = pneg %p317
        $region42: #{etm_forward.1} parent=11 // pred_check_branch
          %418 = sbr.rel (%p416) target = $region44
        $region43: #{etm_forward.1} parent=11 // pred_region
          _
        $region44: #{etm_forward.1} parent=11 // pred_fallthru
          _
        // Predicated region
        $region45: #{etm_forward.1} parent=11 // pred_check
          %p419 = pneg %p338
        $region46: #{etm_forward.1} parent=11 // pred_check_branch
          %421 = sbr.rel (%p419) target = $region48
        $region47: #{etm_forward.1} parent=11 // pred_region
          _
        $region48: #{etm_forward.1} parent=11 // pred_fallthru
          _
      $region12: #{etm_forward.1} parent=5 // pred_fallthru
        _
      %p422 = scmp.lt.s32.totalorder %s23, 4
      // Predicated region
      $region49: #{etm_forward.1} parent=5 // pred_check
        %p423 = pneg %p422
      $region50: #{etm_forward.1} parent=5 // pred_check_branch
        %425 = sbr.rel (%p423) target = $region52
      $region51: #{etm_forward.1} parent=5 // pred_region
        // Predicated region
        $region53: #{etm_forward.1} parent=51 // pred_check
          %p426 = pneg %p59
        $region54: #{etm_forward.1} parent=51 // pred_check_branch
          %428 = sbr.rel (%p426) target = $region56
        $region55: #{etm_forward.1} parent=51 // pred_region
          %s429 = ssub.s32 1, %s30
          %s430 = smul.u32 %s31, %s429
          %p431 = scmp.lt.s32.totalorder %s430, 1
          %s432 = scalar_select %p431, %s430, 1
          %s433 = smul.addr %s432, 8
          %s434 = scalar_lea.vmem %s0, %s433
          %s435 = ssub.s32 1, %s30
          %s436 = smul.u32 %s31, %s435
        $region56: #{etm_forward.1} parent=51 // pred_fallthru
          _
        // Predicated region
        $region57: #{etm_forward.1} parent=51 // pred_check
          %p437 = pneg %p87
        $region58: #{etm_forward.1} parent=51 // pred_check_branch
          %439 = sbr.rel (%p437) target = $region60
        $region59: #{etm_forward.1} parent=51 // pred_region
          %s440 = smul.u32 %s31, %s30
          %p441 = scmp.lt.s32.totalorder %s440, 1
          %s442 = scalar_select %p441, %s440, 1
          %s443 = smul.addr %s442, 8
          %s444 = scalar_lea.vmem %s1, %s443
          %s445 = smul.u32 %s31, %s30
        $region60: #{etm_forward.1} parent=51 // pred_fallthru
          _
        // Predicated region
        $region61: #{etm_forward.1} parent=51 // pred_check
          %p446 = pneg %p117
        $region62: #{etm_forward.1} parent=51 // pred_check_branch
          %448 = sbr.rel (%p446) target = $region64
        $region63: #{etm_forward.1} parent=51 // pred_region
          %s449 = ssub.s32 1, %s30
          %s450 = smul.u32 %s31, %s449
          %s451 = smul.u32 16, %s450
          %p452 = scmp.lt.s32.totalorder %s451, 31
          %s453 = scalar_select %p452, %s451, 31
          %s454 = smul.addr %s453, 8
          %s455 = scalar_lea.vmem %s2, %s454
          %s456 = ssub.s32 1, %s30
          %s457 = smul.u32 %s31, %s456
          %s458 = smul.u32 16, %s457
        $region64: #{etm_forward.1} parent=51 // pred_fallthru
          _
        // Predicated region
        $region65: #{etm_forward.1} parent=51 // pred_check
          %p459 = pneg %p143
        $region66: #{etm_forward.1} parent=51 // pred_check_branch
          %461 = sbr.rel (%p459) target = $region68
        $region67: #{etm_forward.1} parent=51 // pred_region
          %s462 = smul.u32 16, %s31
          %p463 = scmp.lt.s32.totalorder %s462, 31
          %s464 = scalar_select %p463, %s462, 31
          %s465 = smul.addr %s464, 8
          %s466 = scalar_lea.vmem %s3, %s465
          %s467 = smul.u32 16, %s31
        $region68: #{etm_forward.1} parent=51 // pred_fallthru
          _
      $region52: #{etm_forward.1} parent=5 // pred_fallthru
        _
      %p468 = scmp.le.s32.totalorder 1, %s23
      %p469 = scmp.lt.s32.totalorder %s23, 5
      %p470 = pnand %p468, %p469
      %p471 = pneg %p470
      // Predicated region
      $region69: #{etm_forward.1} parent=5 // pred_check
        _
      $region70: #{etm_forward.1} parent=5 // pred_check_branch
        %473 = sbr.rel (%p470) target = $region72
      $region71: #{etm_forward.1} parent=5 // pred_region
        %s474 = ssub.s32 %s23, 1
        %s475 = ssub.s32 1, %s32
        %s476 = smul.u32 %s33, %s475
        %p477 = scmp.lt.s32.totalorder %s476, 1
        %s478 = scalar_select %p477, %s476, 1
        %s479 = smul.addr %s478, 8
        %s480 = scalar_lea.vmem %s0, %s479
        %p481 = pneg %p65
        %p482 = pneg %p62
        %s483 = smul.u32 %s33, %s32
        %p484 = scmp.lt.s32.totalorder %s483, 1
        %s485 = scalar_select %p484, %s483, 1
        %s486 = smul.addr %s485, 8
        %s487 = scalar_lea.vmem %s1, %s486
        %p488 = pneg %p93
        %p489 = pneg %p90
        %s490 = ssub.s32 1, %s32
        %s491 = smul.u32 %s33, %s490
        %s492 = smul.u32 16, %s491
        %p493 = scmp.lt.s32.totalorder %s492, 31
        %s494 = scalar_select %p493, %s492, 31
        %s495 = smul.addr %s494, 8
        %s496 = scalar_lea.vmem %s2, %s495
        %p497 = pneg %p123
        %p498 = pneg %p120
        %s499 = smul.u32 16, %s33
        %p500 = scmp.lt.s32.totalorder %s499, 31
        %s501 = scalar_select %p500, %s499, 31
        %s502 = smul.addr %s501, 8
        %s503 = scalar_lea.vmem %s3, %s502
        %p504 = pneg %p149
        %p505 = pneg %p146
        %p506 = pneg %p170
        %p507 = pneg %p167
        %p508 = pneg %p191
        %p509 = pneg %p188
        %p510 = pneg %p212
        %p511 = pneg %p209
        %p512 = pneg %p233
        %p513 = pneg %p230
        %p514 = pneg %p254
        %p515 = pneg %p251
        %p516 = pneg %p275
        %p517 = pneg %p272
        %p518 = pneg %p296
        %p519 = pneg %p293
        %p520 = pneg %p317
        %p521 = pneg %p314
        %p522 = pneg %p338
        %p523 = pneg %p335
        %p524 = pneg %p359
        %p525 = pneg %p356
        %p526 = pneg %p380
        %p527 = pneg %p377
        %s528 = ssub.s32 1, %s32
        %s529 = smul.u32 %s33, %s528
        %p530 = scmp.lt.s32.totalorder %s529, 1
        %s531 = scalar_select %p530, %s529, 1
        %s532 = smul.addr %s531, 8
        %s533 = scalar_lea.vmem %s0, %s532
        %s534 = ssub.s32 1, %s32
        %s535 = smul.u32 %s33, %s534
        %s536 = smul.u32 %s33, %s32
        %p537 = scmp.lt.s32.totalorder %s536, 1
        %s538 = scalar_select %p537, %s536, 1
        %s539 = smul.addr %s538, 8
        %s540 = scalar_lea.vmem %s1, %s539
        %s541 = smul.u32 %s33, %s32
        %s542 = ssub.s32 1, %s32
        %s543 = smul.u32 %s33, %s542
        %s544 = smul.u32 16, %s543
        %p545 = scmp.lt.s32.totalorder %s544, 31
        %s546 = scalar_select %p545, %s544, 31
        %s547 = smul.addr %s546, 8
        %s548 = scalar_lea.vmem %s2, %s547
        %s549 = ssub.s32 1, %s32
        %s550 = smul.u32 %s33, %s549
        %s551 = smul.u32 16, %s550
        %s552 = smul.u32 16, %s33
        %p553 = scmp.lt.s32.totalorder %s552, 31
        %s554 = scalar_select %p553, %s552, 31
        %s555 = smul.addr %s554, 8
        %s556 = scalar_lea.vmem %s3, %s555
        %s557 = smul.u32 16, %s33
        %v558 = vld [vmem:[%s4] sm:$0xff]
        %v559 = vld [vmem:[%s4 + $0x8] sm:$0xff]
        %v560 = vld [vmem:[%s556] sm:$0xff]
        %v561 = vld [vmem:[%s556 + $0x8] sm:$0xff]
        %v562 = vld [vmem:[%s556 + $0x10] sm:$0xff]
        %v563 = vld [vmem:[%s556 + $0x18] sm:$0xff]
        %v564 = vld [vmem:[%s556 + $0x20] sm:$0xff]
        %v565 = vld [vmem:[%s556 + $0x28] sm:$0xff]
        %v566 = vld [vmem:[%s556 + $0x30] sm:$0xff]
        %v567 = vld [vmem:[%s556 + $0x38] sm:$0xff]
        %v568 = vld [vmem:[%s556 + $0x40] sm:$0xff]
        %v569 = vld [vmem:[%s556 + $0x48] sm:$0xff]
        %v570 = vld [vmem:[%s556 + $0x50] sm:$0xff]
        %v571 = vld [vmem:[%s556 + $0x58] sm:$0xff]
        %v572 = vld [vmem:[%s556 + $0x60] sm:$0xff]
        %v573 = vld [vmem:[%s556 + $0x68] sm:$0xff]
        %v574 = vld [vmem:[%s556 + $0x70] sm:$0xff]
        %v575 = vld [vmem:[%s556 + $0x78] sm:$0xff]
        %vm576 = vcmask 523264
        %v578 = vsel %vm576, %v558, 0
        %v581 = vsel %vm576, %v559, 0
        %v584 = vsel %vm576, %v560, 0
        %v587 = vsel %vm576, %v561, 0
        %v590 = vsel %vm576, %v562, 0
        %v593 = vsel %vm576, %v563, 0
        %v596 = vsel %vm576, %v564, 0
        %v599 = vsel %vm576, %v565, 0
        %v602 = vsel %vm576, %v566, 0
        %v605 = vsel %vm576, %v567, 0
        %v608 = vsel %vm576, %v568, 0
        %v611 = vsel %vm576, %v569, 0
        %v614 = vsel %vm576, %v570, 0
        %v617 = vsel %vm576, %v571, 0
        %v620 = vsel %vm576, %v572, 0
        %v623 = vsel %vm576, %v573, 0
        %v626 = vsel %vm576, %v574, 0
        %v629 = vsel %vm576, %v575, 0
        %631 = vmatpush.xpose.msra.mxu0 %v629
        %632 = vmatpush.xpose.msra.mxu0 %v626
        %633 = vmatpush.xpose.msra.mxu0 %v623
        %634 = vmatpush.xpose.msra.mxu0 %v620
        %635 = vmatpush.xpose.msra.mxu0 %v617
        %636 = vmatpush.xpose.msra.mxu0 %v614
        %637 = vmatpush.xpose.msra.mxu0 %v611
        %638 = vmatpush.xpose.msra.mxu0 %v608
        %639 = vmatpush.xpose.msra.mxu0 %v605
        %640 = vmatpush.xpose.msra.mxu0 %v602
        %641 = vmatpush.xpose.msra.mxu0 %v599
        %642 = vmatpush.xpose.msra.mxu0 %v596
        %643 = vmatpush.xpose.msra.mxu0 %v593
        %644 = vmatpush.xpose.msra.mxu0 %v590
        %645 = vmatpush.xpose.msra.mxu0 %v587
        %646 = vmatpush.xpose.msra.mxu0 %v584
        %647 = vmatmul.f32.gmra.mxu0 %v578
        %v648 = vpop.f32.mrf.mxu0
        %v649 = vadd.f32 0.0, %v648
        %650 = vmatmul.f32.gmra.mxu0 %v581
        %v651 = vpop.f32.mrf.mxu0
        %v652 = vadd.f32 0.0, %v651
        %653 = vdwg.mxu0
        %p654 = scmp.eq.s32.totalorder %s32, 0
        // Predicated region
        $region73: #{etm_forward.1} parent=71 // pred_check
          %p655 = pneg %p654
        $region74: #{etm_forward.1} parent=71 // pred_check_branch
          %657 = sbr.rel (%p655) target = $region76
        $region75: #{etm_forward.1} parent=71 // pred_region
          %p658 = scmp.eq.s32.totalorder %s33, 0
          // Predicated region
          $region77: #{etm_forward.1} parent=75 // pred_check
            %p659 = pneg %p658
          $region78: #{etm_forward.1} parent=75 // pred_check_branch
            %661 = sbr.rel (%p659) target = $region80
          $region79: #{etm_forward.1} parent=75 // pred_region
            %662 = vst.msk [vmem:[#allocation2] sm:$0xff] %vm576, 0.0
            %vm663 = vcmask 7168
            %664 = vst.msk [vmem:[#allocation4] sm:$0xff] %vm663, -inf
            %665 = vst.msk [vmem:[#allocation4 + $0x8] sm:$0xff] %vm663, -inf
            %666 = vst.msk [vmem:[#allocation5] sm:$0xff] %vm663, 0.0
            %667 = vst.msk [vmem:[#allocation5 + $0x8] sm:$0xff] %vm663, 0.0
            %vm668 = vcmask 0
            %669 = vst.msk [vmem:[#allocation6] sm:$0x1] %vm668, 0.0
          $region80: #{etm_forward.1} parent=75 // pred_fallthru
            _
          %v670 = vld [vmem:[#allocation2] sm:$0xff]
          %v671 = vld [vmem:[%s533] sm:$0xff]
          %v672 = vld [vmem:[%s548] sm:$0xff]
          %v673 = vld [vmem:[%s548 + $0x8] sm:$0xff]
          %v674 = vld [vmem:[%s548 + $0x10] sm:$0xff]
          %v675 = vld [vmem:[%s548 + $0x18] sm:$0xff]
          %v676 = vld [vmem:[%s548 + $0x20] sm:$0xff]
          %v677 = vld [vmem:[%s548 + $0x28] sm:$0xff]
          %v678 = vld [vmem:[%s548 + $0x30] sm:$0xff]
          %v679 = vld [vmem:[%s548 + $0x38] sm:$0xff]
          %v680 = vld [vmem:[%s548 + $0x40] sm:$0xff]
          %v681 = vld [vmem:[%s548 + $0x48] sm:$0xff]
          %v682 = vld [vmem:[%s548 + $0x50] sm:$0xff]
          %v683 = vld [vmem:[%s548 + $0x58] sm:$0xff]
          %v684 = vld [vmem:[%s548 + $0x60] sm:$0xff]
          %v685 = vld [vmem:[%s548 + $0x68] sm:$0xff]
          %v686 = vld [vmem:[%s548 + $0x70] sm:$0xff]
          %v687 = vld [vmem:[%s548 + $0x78] sm:$0xff]
          %688 = vmatpush.msra.mxu0 %v687
          %689 = vmatpush.msra.mxu0 %v686
          %690 = vmatpush.msra.mxu0 %v685
          %691 = vmatpush.msra.mxu0 %v684
          %692 = vmatpush.msra.mxu0 %v683
          %693 = vmatpush.msra.mxu0 %v682
          %694 = vmatpush.msra.mxu0 %v681
          %695 = vmatpush.msra.mxu0 %v680
          %696 = vmatpush.msra.mxu0 %v679
          %697 = vmatpush.msra.mxu0 %v678
          %698 = vmatpush.msra.mxu0 %v677
          %699 = vmatpush.msra.mxu0 %v676
          %700 = vmatpush.msra.mxu0 %v675
          %701 = vmatpush.msra.mxu0 %v674
          %702 = vmatpush.msra.mxu0 %v673
          %703 = vmatpush.msra.mxu0 %v672
          %704 = vmatmul.f32.gmra.mxu0 %v671
          %v705 = vpop.f32.mrf.mxu0
          %v706 = vadd.f32 0.0, %v705
          %707 = vdwg.mxu0
          %v708 = vadd.f32 %v670, %v706
          %709 = vst.msk [vmem:[#allocation2] sm:$0xff] %vm576, %v708
          %v710 = vld [vmem:[#allocation4] sm:$0xff]
          %v711 = vld [vmem:[#allocation4 + $0x8] sm:$0xff]
          %712 = vmax.xlane.f32.xlu0 %v649
          %v713 = vpop.xlane.xlu0 %712
          %714 = vmax.xlane.f32.xlu0 %v652
          %v715 = vpop.xlane.xlu0 %714
          %v716 = vmax.f32 %v710, %v713
          %v717 = vmax.f32 %v711, %v715
          %v718 = vld [vmem:[#allocation5] sm:$0xff]
          %v719 = vld [vmem:[#allocation5 + $0x8] sm:$0xff]
          %v720 = vsub.f32 %v710, %v716
          %v721 = vsub.f32 %v711, %v717
          %v722 = vmul.f32 %v720, 1.442695
          %v723 = vpow.pop %v722
          %v724 = vmul.f32 %v721, 1.442695
          %v725 = vpow.pop %v724
          %v726 = vmul.f32 %v718, %v723
          %v727 = vmul.f32 %v719, %v725
          %729 = vset.pattern.permute.xlu0 0
          %730 = vperm.xlu0 %729, %v716
          %v731 = vpop.permute.xlu0 %730
          %734 = vset.pattern.permute.xlu0 0
          %735 = vperm.xlu0 %734, %v717
          %v736 = vpop.permute.xlu0 %735
          %v738 = vsub.f32 %v649, %v731
          %v739 = vsub.f32 %v652, %v736
          %v740 = vmul.f32 %v738, 1.442695
          %v741 = vpow.pop %v740
          %v742 = vmul.f32 %v739, 1.442695
          %v743 = vpow.pop %v742
          %744 = vadd.xlane.f32.xlu0 %v741
          %v745 = vpop.xlane.xlu0 %744
          %746 = vadd.xlane.f32.xlu0 %v743
          %v747 = vpop.xlane.xlu0 %746
          %v748 = vadd.f32 %v726, %v745
          %v749 = vadd.f32 %v727, %v747
          %vm750 = vcmask 7168
          %751 = vst.msk [vmem:[#allocation5] sm:$0xff] %vm750, %v748
          %752 = vst.msk [vmem:[#allocation5 + $0x8] sm:$0xff] %vm750, %v749
          %753 = vst.msk [vmem:[#allocation4] sm:$0xff] %vm750, %v716
          %754 = vst.msk [vmem:[#allocation4 + $0x8] sm:$0xff] %vm750, %v717
          %p755 = scmp.eq.s32.totalorder %s33, 1
          // Predicated region
          $region81: #{etm_forward.1} parent=75 // pred_check
            %p756 = pneg %p755
          $region82: #{etm_forward.1} parent=75 // pred_check_branch
            %758 = sbr.rel (%p756) target = $region84
          $region83: #{etm_forward.1} parent=75 // pred_region
            %v759 = vld [vmem:[#allocation2] sm:$0xff]
            %v760 = vld [vmem:[%s5] sm:$0x1]
            %v762 = vperm.slane %v760, 0
            %v764 = vadd.f32 %v759, %v762
            %v765 = vtanh.pop %v764
            %v766 = vld [vmem:[%s6] sm:$0xff]
            %v767 = vld [vmem:[%s6 + $0x8] sm:$0xff]
            %v768 = vld [vmem:[%s6 + $0x10] sm:$0xff]
            %v769 = vld [vmem:[%s6 + $0x18] sm:$0xff]
            %v770 = vld [vmem:[%s6 + $0x20] sm:$0xff]
            %v771 = vld [vmem:[%s6 + $0x28] sm:$0xff]
            %v772 = vld [vmem:[%s6 + $0x30] sm:$0xff]
            %v773 = vld [vmem:[%s6 + $0x38] sm:$0xff]
            %v774 = vld [vmem:[%s7] sm:$0x1]
            %v776 = vperm.slane %v774, 0
            %v779 = vsel %vm576, %v765, 0
            %781 = vmatpush.msra.mxu0 0.0
            %782 = vmatpush.msra.mxu0 0.0
            %783 = vmatpush.msra.mxu0 0.0
            %784 = vmatpush.msra.mxu0 0.0
            %785 = vmatpush.msra.mxu0 0.0
            %786 = vmatpush.msra.mxu0 0.0
            %787 = vmatpush.msra.mxu0 0.0
            %788 = vmatpush.msra.mxu0 0.0
            %789 = vmatpush.msra.mxu0 %v773
            %790 = vmatpush.msra.mxu0 %v772
            %791 = vmatpush.msra.mxu0 %v771
            %792 = vmatpush.msra.mxu0 %v770
            %793 = vmatpush.msra.mxu0 %v769
            %794 = vmatpush.msra.mxu0 %v768
            %795 = vmatpush.msra.mxu0 %v767
            %796 = vmatpush.msra.mxu0 %v766
            %797 = vmatmul.f32.gmra.mxu0 %v779
            %v798 = vpop.f32.mrf.mxu0
            %v799 = vadd.f32 %v776, %v798
            %800 = vdwg.mxu0
            %v801 = vtanh.pop %v799
            %v802 = vld [vmem:[%s8] sm:$0xff]
            %v803 = vld [vmem:[%s8 + $0x8] sm:$0xff]
            %v804 = vld [vmem:[%s8 + $0x10] sm:$0xff]
            %v805 = vld [vmem:[%s8 + $0x18] sm:$0xff]
            %v806 = vld [vmem:[%s8 + $0x20] sm:$0xff]
            %v807 = vld [vmem:[%s8 + $0x28] sm:$0xff]
            %v808 = vld [vmem:[%s8 + $0x30] sm:$0xff]
            %v809 = vld [vmem:[%s8 + $0x38] sm:$0xff]
            %v810 = vld [vmem:[%s9] sm:$0x1]
            %v812 = vperm.slane %v810, 0
            %v815 = vsel %vm576, %v801, 0
            %817 = vmatpush.msra.mxu0 0.0
            %818 = vmatpush.msra.mxu0 0.0
            %819 = vmatpush.msra.mxu0 0.0
            %820 = vmatpush.msra.mxu0 0.0
            %821 = vmatpush.msra.mxu0 0.0
            %822 = vmatpush.msra.mxu0 0.0
            %823 = vmatpush.msra.mxu0 0.0
            %824 = vmatpush.msra.mxu0 0.0
            %825 = vmatpush.msra.mxu0 %v809
            %826 = vmatpush.msra.mxu0 %v808
            %827 = vmatpush.msra.mxu0 %v807
            %828 = vmatpush.msra.mxu0 %v806
            %829 = vmatpush.msra.mxu0 %v805
            %830 = vmatpush.msra.mxu0 %v804
            %831 = vmatpush.msra.mxu0 %v803
            %832 = vmatpush.msra.mxu0 %v802
            %833 = vmatmul.f32.gmra.mxu0 %v815
            %v834 = vpop.f32.mrf.mxu0
            %v835 = vadd.f32 %v812, %v834
            %836 = vdwg.mxu0
            %v837 = vld [vmem:[%s10] sm:$0xff]
            %v838 = vld [vmem:[%s10 + $0x8] sm:$0xff]
            %v839 = vld [vmem:[%s10 + $0x10] sm:$0xff]
            %v840 = vld [vmem:[%s10 + $0x18] sm:$0xff]
            %v841 = vld [vmem:[%s10 + $0x20] sm:$0xff]
            %v842 = vld [vmem:[%s10 + $0x28] sm:$0xff]
            %v843 = vld [vmem:[%s10 + $0x30] sm:$0xff]
            %v844 = vld [vmem:[%s10 + $0x38] sm:$0xff]
            %v845 = vld [vmem:[%s11] sm:$0x1]
            %v847 = vperm.slane %v845, 0
            %849 = vmatpush.msra.mxu0 0.0
            %850 = vmatpush.msra.mxu0 0.0
            %851 = vmatpush.msra.mxu0 0.0
            %852 = vmatpush.msra.mxu0 0.0
            %853 = vmatpush.msra.mxu0 0.0
            %854 = vmatpush.msra.mxu0 0.0
            %855 = vmatpush.msra.mxu0 0.0
            %856 = vmatpush.msra.mxu0 0.0
            %857 = vmatpush.msra.mxu0 %v844
            %858 = vmatpush.msra.mxu0 %v843
            %859 = vmatpush.msra.mxu0 %v842
            %860 = vmatpush.msra.mxu0 %v841
            %861 = vmatpush.msra.mxu0 %v840
            %862 = vmatpush.msra.mxu0 %v839
            %863 = vmatpush.msra.mxu0 %v838
            %864 = vmatpush.msra.mxu0 %v837
            %865 = vmatmul.f32.gmra.mxu0 %v815
            %v866 = vpop.f32.mrf.mxu0
            %v867 = vadd.f32 %v847, %v866
            %868 = vdwg.mxu0
            %v869 = vadd.f32 %v867, 1.0
            %v870 = vmul.f32 %v835, %v835
            %v871 = vsub.f32 %v869, %v870
            %v872 = vmul.f32 %v867, 1.442695
            %v873 = vpow.pop %v872
            %v874 = vsub.f32 %v871, %v873
            %vm875 = vcmask 130048
            %v876 = vsel %vm875, %v874, 0.0
            %877 = vadd.xlane.f32.xlu0 %v876
            %v878 = vpop.xlane.xlu0 %877
            %v879 = vmul.f32 %v878, -0.5
            %v880 = vrot.slane %v879, 4
            %v881 = vadd.f32 %v879, %v880
            %v882 = vrot.slane %v881, 2
            %v883 = vadd.f32 %v881, %v882
            %v884 = vrot.slane %v883, 1
            %v885 = vadd.f32 %v883, %v884
            %v886 = vrcp.pop 8.0
            %v887 = vmul.f32 8.0, %v886
            %v888 = vsub.f32 1.0, %v887
            %v889 = vmul.f32 %v886, %v888
            %v890 = vadd.f32 %v886, %v889
            %vm891 = vweird.f32 %v886
            %v892 = vsel %vm891, %v886, %v890
            %v893 = vmul.f32 %v885, %v892
            %vm894 = vcmask 0
            %895 = vst.msk [vmem:[#allocation9] sm:$0x1] %vm894, %v893
            %v896 = vld [vmem:[%s12] sm:$0xff]
            %v897 = vmul.f32 %v867, 0.5
            %v898 = vmul.f32 %v897, 1.442695
            %v899 = vpow.pop %v898
            %v900 = vmul.f32 %v896, %v899
            %v901 = vadd.f32 %v900, %v835
            %v902 = vsel %vm875, %v901, -inf
            %903 = vmax.xlane.f32.xlu0 %v902
            %v904 = vpop.xlane.xlu0 %903
            %v905 = vsub.f32 %v901, %v904
            %v906 = vmul.f32 %v905, 1.442695
            %v907 = vpow.pop %v906
            %v908 = vsel %vm875, %v907, 0.0
            %909 = vadd.xlane.f32.xlu0 %v908
            %v910 = vpop.xlane.xlu0 %909
            %v911 = vrcp.pop %v910
            %v912 = vmul.f32 %v907, %v911
            %913 = vst.msk [vmem:[#allocation3] sm:$0xff] %vm875, %v912
            %v914 = vld [vmem:[#allocation5] sm:$0xff]
            %v915 = vld [vmem:[#allocation5 + $0x8] sm:$0xff]
            %v916 = vrcp.pop %v914
            %v917 = vrcp.pop %v915
            %918 = vst.msk [vmem:[#allocation5] sm:$0xff] %vm750, %v916
            %919 = vst.msk [vmem:[#allocation5 + $0x8] sm:$0xff] %vm750, %v917
          $region84: #{etm_forward.1} parent=75 // pred_fallthru
            _
        $region76: #{etm_forward.1} parent=71 // pred_fallthru
          _
        %p920 = scmp.eq.s32.totalorder %s32, 1
        // Predicated region
        $region85: #{etm_forward.1} parent=71 // pred_check
          %p921 = pneg %p920
        $region86: #{etm_forward.1} parent=71 // pred_check_branch
          %923 = sbr.rel (%p921) target = $region88
        $region87: #{etm_forward.1} parent=71 // pred_region
          %v924 = vld [vmem:[#allocation4] sm:$0xff]
          %v925 = vld [vmem:[#allocation4 + $0x8] sm:$0xff]
          %927 = vset.pattern.permute.xlu0 0
          %928 = vperm.xlu0 %927, %v924
          %v929 = vpop.permute.xlu0 %928
          %932 = vset.pattern.permute.xlu0 0
          %933 = vperm.xlu0 %932, %v925
          %v934 = vpop.permute.xlu0 %933
          %v936 = vsub.f32 %v649, %v929
          %v937 = vsub.f32 %v652, %v934
          %v938 = vmul.f32 %v936, 1.442695
          %v939 = vpow.pop %v938
          %v940 = vmul.f32 %v937, 1.442695
          %v941 = vpow.pop %v940
          %v942 = vld [vmem:[#allocation5] sm:$0xff]
          %v943 = vld [vmem:[#allocation5 + $0x8] sm:$0xff]
          %945 = vset.pattern.permute.xlu0 0
          %946 = vperm.xlu0 %945, %v942
          %v947 = vpop.permute.xlu0 %946
          %950 = vset.pattern.permute.xlu0 0
          %951 = vperm.xlu0 %950, %v943
          %v952 = vpop.permute.xlu0 %951
          %v954 = vmul.f32 %v939, %v947
          %v955 = vmul.f32 %v941, %v952
          %v956 = vld [vmem:[#allocation3] sm:$0xff]
          %v957 = vld [vmem:[%s540] sm:$0xff]
          %vm958 = vcmask 130048
          %v960 = vsel %vm958, %v956, 0
          %962 = vmatpush.msra.mxu0 0.0
          %963 = vmatpush.msra.mxu0 0.0
          %964 = vmatpush.msra.mxu0 0.0
          %965 = vmatpush.msra.mxu0 0.0
          %966 = vmatpush.msra.mxu0 0.0
          %967 = vmatpush.msra.mxu0 0.0
          %968 = vmatpush.msra.mxu0 0.0
          %969 = vmatpush.msra.mxu0 0.0
          %970 = vmatpush.msra.mxu0 0.0
          %971 = vmatpush.msra.mxu0 0.0
          %972 = vmatpush.msra.mxu0 0.0
          %973 = vmatpush.msra.mxu0 0.0
          %974 = vmatpush.msra.mxu0 0.0
          %975 = vmatpush.msra.mxu0 0.0
          %976 = vmatpush.msra.mxu0 %v955
          %977 = vmatpush.msra.mxu0 %v954
          %978 = vmatmul.f32.gmra.mxu0 %v960
          %v979 = vpop.f32.mrf.mxu0
          %v980 = vadd.f32 1e-06, %v979
          %981 = vdwg.mxu0
          %v982 = vlog2.pop %v980
          %v983 = vmul.f32 %v982, 0.6931472
          %v984 = vmul.f32 %v957, %v983
          %985 = vadd.xlane.f32.xlu0 %v984
          %v986 = vpop.xlane.xlu0 %985
          %v987 = vld [vmem:[#allocation6] sm:$0x1]
          %v988 = vrot.slane %v986, 4
          %v989 = vadd.f32 %v986, %v988
          %v990 = vrot.slane %v989, 2
          %v991 = vadd.f32 %v989, %v990
          %v992 = vrot.slane %v991, 1
          %v993 = vadd.f32 %v991, %v992
          %v994 = vadd.f32 %v987, %v993
          %vm995 = vcmask 0
          %996 = vst.msk [vmem:[#allocation6] sm:$0x1] %vm995, %v994
          %p997 = scmp.eq.s32.totalorder %s33, 1
          // Predicated region
          $region89: #{etm_forward.1} parent=87 // pred_check
            %p998 = pneg %p997
          $region90: #{etm_forward.1} parent=87 // pred_check_branch
            %1000 = sbr.rel (%p998) target = $region92
          $region91: #{etm_forward.1} parent=87 // pred_region
            %v1001 = vld [vmem:[#allocation6] sm:$0x1]
            %v1002 = vsub.f32 0.0, %v1001
            %v1003 = vmul.f32 %v1002, 0.125
            %1004 = vst.msk [vmem:[#allocation7] sm:$0x1] %vm995, %v1003
          $region92: #{etm_forward.1} parent=87 // pred_fallthru
            _
        $region88: #{etm_forward.1} parent=71 // pred_fallthru
          _
        // Predicated region
        $region93: #{etm_forward.1} parent=71 // pred_check
          %p1005 = pneg %p356
        $region94: #{etm_forward.1} parent=71 // pred_check_branch
          %1007 = sbr.rel (%p1005) target = $region96
        $region95: #{etm_forward.1} parent=71 // pred_region
          %1009 = vsyncadd [#allocation8], 0
          %s1011 = sshll.u32 [#allocation7], 4
          %s1012 = int_to_ptr.vmem [resolvable:$true] %s1011
          %s1013 = sshll.u32 %s13, 4
          %s1014 = int_to_ptr.hbm [resolvable:$true] %s1013
          %1016 = dma.vmem_to_hbm [thread:$0]  %s1012, 16, %s1014, [#allocation8]
        $region96: #{etm_forward.1} parent=71 // pred_fallthru
          _
        // Predicated region
        $region97: #{etm_forward.1} parent=71 // pred_check
          %p1017 = pneg %p377
        $region98: #{etm_forward.1} parent=71 // pred_check_branch
          %1019 = sbr.rel (%p1017) target = $region100
        $region99: #{etm_forward.1} parent=71 // pred_region
          %1021 = vsyncadd [#allocation10], 0
          %s1023 = sshll.u32 [#allocation9], 4
          %s1024 = int_to_ptr.vmem [resolvable:$true] %s1023
          %s1025 = sshll.u32 %s14, 4
          %s1026 = int_to_ptr.hbm [resolvable:$true] %s1025
          %1028 = dma.vmem_to_hbm [thread:$0]  %s1024, 16, %s1026, [#allocation10]
        $region100: #{etm_forward.1} parent=71 // pred_fallthru
          _
        // Predicated region
        $region101: #{etm_forward.1} parent=71 // pred_check
          %p1029 = pneg %p356
        $region102: #{etm_forward.1} parent=71 // pred_check_branch
          %1031 = sbr.rel (%p1029) target = $region104
        $region103: #{etm_forward.1} parent=71 // pred_region
          %1033 = dma.done [#allocation8], 16
        $region104: #{etm_forward.1} parent=71 // pred_fallthru
          _
        // Predicated region
        $region105: #{etm_forward.1} parent=71 // pred_check
          %p1034 = pneg %p377
        $region106: #{etm_forward.1} parent=71 // pred_check_branch
          %1036 = sbr.rel (%p1034) target = $region108
        $region107: #{etm_forward.1} parent=71 // pred_region
          %1038 = dma.done [#allocation10], 16
        $region108: #{etm_forward.1} parent=71 // pred_fallthru
          _
      $region72: #{etm_forward.1} parent=5 // pred_fallthru
        _
      %p1039 = scmp.le.s32.totalorder 2, %s23
      // Predicated region
      $region109: #{etm_forward.1} parent=5 // pred_check
        %p1040 = pneg %p1039
      $region110: #{etm_forward.1} parent=5 // pred_check_branch
        %1042 = sbr.rel (%p1040) target = $region112
      $region111: #{etm_forward.1} parent=5 // pred_region
        %s1043 = ssub.s32 %s23, 2
      $region112: #{etm_forward.1} parent=5 // pred_fallthru
        _
    $region6: #{etm_forward.1} parent=1 // loop_footer
      %s27 = sadd.s32 1, %s23
    $region7: #{etm_forward.1} parent=1 // loop_footer_branch
      %22 = sbr.rel target = $region3
    $region8: #{etm_forward.1} parent=1 // loop_exit
      _
    %1044 = vsyncpa [#allocation8], 1
    %s1045 = scalar_lea.sflag [#allocation8], 1
    %1046 = vsyncpa %s1045, 1
    %1047 = vsyncpa [#allocation10], 1

</llo_original>
